<compile_context>
chip_gen: v7x
topology: tpu7x:2x2x1
jax: 0.10.0
libtpu: 0.0.40
codegen_flags: <defaults>
</compile_context>

<pallas_src>
import functools

import jax
import jax.numpy as jnp
from jax import lax
from jax.experimental import pallas as pl
from jax.experimental.pallas import tpu as pltpu


def _round_up(v, m):
    return -(-v // m) * m


def _default_batch_block(batch):
    """How many batch elements to fold into one grid step.

    v7x exposes 2 TensorCores per chip -> keep >= 2 grid blocks so the
    "parallel" grid axis can use both.  v5e/v6e have a single TensorCore
    (the grid is a serial loop) -> fold everything into one step.
    """
    try:
        kind = jax.devices()[0].device_kind.lower()
    except Exception:
        kind = ""
    n_tc = 2 if "7" in kind else 1
    target = max(1, -(-batch // n_tc))
    for bt in range(target, 0, -1):          # largest divisor of batch <= target
        if batch % bt == 0:
            return bt
    return 1


def _convlstm_kernel(w_ref, b_ref, x_ref, h_ref, c_ref,
                     h_out_ref, c_out_ref, xh_s, patch_s,
                     *, H, W, KH, KW, CIN, CH, CT, CTP, PH, PW, BT, OFFA):
    """One batch-block (BT elements) per grid step.

    w_ref     : (4*CH, KH*KW*CTP)   conv weight, contraction order (dy, dx, c)
    b_ref     : (4*CH, 1)           conv bias (f32)
    x_ref     : (BT, CIN, H*W)      input, channel-major, spatially flattened
    h_ref     : (BT, CH,  H*W)      current hidden state
    c_ref     : (BT, CH,  H*W)      current cell state
    h_out_ref : (BT, CH,  H*W)      next hidden state (aliases h_ref's HBM)
    c_out_ref : (BT, CH,  H*W)      next cell state   (aliases c_ref's HBM)
    xh_s      : (BT, CTP, L)        VMEM scratch: zero-padded flat (x, h) slab
    patch_s   : (KH*KW*CTP, BT*H*W) VMEM scratch: im2col patches
    """
    HW = H * W
    N = BT * HW
    dt = xh_s.dtype
    # Interior image lives at lane offset OFFA (128-aligned); the original
    # (H-padded, W-padded, flattened) layout had it at PH*W + PW.
    base = OFFA - (PH * W + PW)

    # ---- stage (x, h) channels into the zero-padded flat VMEM slab ---------
    # Zero regions provide the top/bottom (H) halo and the channel padding.
    xh_s[...] = jnp.zeros_like(xh_s)
    for bt in range(BT):                                    # static unroll
        xh_s[bt, 0:CIN, OFFA:OFFA + HW] = x_ref[bt].astype(dt)
        xh_s[bt, CIN:CT, OFFA:OFFA + HW] = h_ref[bt].astype(dt)

    # ---- column (W-border) masks: depend on dx only, built once ------------
    # col pattern repeats per HW chunk, so iota % W works for the folded batch.
    col = lax.broadcasted_iota(jnp.int32, (1, N), 1) % W
    col_masks = []
    for dx in range(KW):
        lo, hi = PW - dx, W - 1 + PW - dx
        col_masks.append(None if (lo <= 0 and hi >= W - 1)
                         else (col >= lo) & (col <= hi))

    # ---- im2col: one contiguous lane slice per tap, stored into scratch ----
    for dy in range(KH):                                    # static unroll
        for dx in range(KW):
            start = base + dy * W + dx                      # static lane offset
            parts = [xh_s[bt, :, start:start + HW] for bt in range(BT)]
            slab = parts[0] if BT == 1 else jnp.concatenate(parts, axis=1)
            m = col_masks[dx]
            if m is not None:                               # border taps only
                slab = jnp.where(m, slab, jnp.zeros_like(slab))
            tap = dy * KW + dx
            patch_s[tap * CTP:(tap + 1) * CTP, :] = slab    # aligned sublanes

    # ---- one MXU matmul, f32 accumulation, bias broadcast over lanes -------
    acc = jnp.dot(w_ref[...], patch_s[...],
                  preferred_element_type=jnp.float32) + b_ref[...]

    # Gate order follows torch.split(combined_conv, hidden, dim=1): i, f, o, g.
    # sigmoid(x) = 0.5*(1 + tanh(x/2)) keeps the nonlinearity on the EUP slot.
    ifo = 0.5 + 0.5 * jnp.tanh(0.5 * acc[:3 * CH, :])
    g_g = jnp.tanh(acc[3 * CH:, :])
    i_g = ifo[:CH, :]
    f_g = ifo[CH:2 * CH, :]
    o_g = ifo[2 * CH:3 * CH, :]

    # ---- state update, per batch element (lane-dense 256-wide slices) ------
    for bt in range(BT):                                    # static unroll
        sl = slice(bt * HW, (bt + 1) * HW)
        c_cur = c_ref[bt].astype(jnp.float32)
        c_next = f_g[:, sl] * c_cur + i_g[:, sl] * g_g[:, sl]
        h_next = o_g[:, sl] * jnp.tanh(c_next)
        c_out_ref[bt] = c_next.astype(c_out_ref.dtype)
        h_out_ref[bt] = h_next.astype(h_out_ref.dtype)


def prepare_conv_lstm_params(weight, bias, matmul_dtype=jnp.bfloat16):
    """Per-layer (time-invariant) weight/bias preprocessing.

    Call ONCE per layer (outside the time loop): OIHW -> (4*Ch, KH*KW*CTP)
    with contraction order (dy, dx, c), channel padding to the sublane pack,
    and cast to the matmul dtype.
    """
    CH4, CT, KH, KW = weight.shape
    pack = 16 if jnp.dtype(matmul_dtype).itemsize == 2 else 8
    CTP = _round_up(CT, pack)
    w_t = jnp.transpose(weight, (0, 2, 3, 1))                # OIHW -> OHWI
    w_t = jnp.pad(w_t, ((0, 0), (0, 0), (0, 0), (0, CTP - CT)))
    wmat = w_t.reshape(CH4, KH * KW * CTP).astype(matmul_dtype)
    bcol = bias.reshape(CH4, 1).astype(jnp.float32)
    return wmat, bcol


@functools.partial(jax.jit,
                   static_argnames=("kernel_size", "matmul_dtype",
                                    "batch_block"))
def conv_lstm_cell_forward(x, h_cur, c_cur, wmat, bcol, *, kernel_size,
                           matmul_dtype=jnp.bfloat16, batch_block=None):
    """ConvLSTMCell.forward.

    x      : (B, Cin, H, W)  NCHW     h_cur, c_cur : (B, Ch, H, W)
    wmat, bcol : outputs of prepare_conv_lstm_params (same matmul_dtype)
    returns (h_next, c_next), each (B, Ch, H, W).
    NOTE: matmul_dtype=bfloat16 (default) reduces conv precision vs. the f32
    PyTorch module; pass jnp.float32 for bit-comparable accuracy.
    """
    B, CIN, H, W = x.shape
    CH = h_cur.shape[1]
    CT = CIN + CH
    KH, KW = kernel_size
    assert KH % 2 == 1 and KW % 2 == 1, "odd kernel sizes only ('same' conv)"
    PH, PW = KH // 2, KW // 2
    HW = H * W
    CH4 = wmat.shape[0]
    CTP = wmat.shape[1] // (KH * KW)
    assert CH4 == 4 * CH and CTP >= CT
    assert jnp.dtype(wmat.dtype) == jnp.dtype(matmul_dtype), \
        "prepare_conv_lstm_params must use the same matmul_dtype"

    BT = _default_batch_block(B) if batch_block is None else batch_block
    assert B % BT == 0
    grid = (B // BT,)

    # 128-lane-aligned interior offset + lane length (whole lane tiles).
    OFFA = _round_up(PH * W + PW, 128)
    L = _round_up(OFFA + HW + PH * W + PW, 128)

    # Free reshapes of NCHW -- no concat / pad / cast HBM passes per step.
    x_flat = x.reshape(B, CIN, HW)
    h_flat = h_cur.reshape(B, CH, HW)
    c_flat = c_cur.reshape(B, CH, HW)

    kernel = functools.partial(_convlstm_kernel, H=H, W=W, KH=KH, KW=KW,
                               CIN=CIN, CH=CH, CT=CT, CTP=CTP,
                               PH=PH, PW=PW, BT=BT, OFFA=OFFA)

    h_next, c_next = pl.pallas_call(
        kernel,
        out_shape=(
            jax.ShapeDtypeStruct((B, CH, HW), c_cur.dtype),   # h_next
            jax.ShapeDtypeStruct((B, CH, HW), c_cur.dtype),   # c_next
        ),
        grid_spec=pltpu.PrefetchScalarGridSpec(
            num_scalar_prefetch=0,
            grid=grid,
            in_specs=[
                pl.BlockSpec((CH4, KH * KW * CTP), lambda b: (0, 0)),  # weight
                pl.BlockSpec((CH4, 1), lambda b: (0, 0)),              # bias
                pl.BlockSpec((BT, CIN, HW), lambda b: (b, 0, 0)),      # x
                pl.BlockSpec((BT, CH, HW), lambda b: (b, 0, 0)),       # h_cur
                pl.BlockSpec((BT, CH, HW), lambda b: (b, 0, 0)),       # c_cur
            ],
            out_specs=[
                pl.BlockSpec((BT, CH, HW), lambda b: (b, 0, 0)),       # h_next
                pl.BlockSpec((BT, CH, HW), lambda b: (b, 0, 0)),       # c_next
            ],
            scratch_shapes=[
                pltpu.VMEM((BT, CTP, L), matmul_dtype),                # flat slab
                pltpu.VMEM((KH * KW * CTP, BT * HW), matmul_dtype),    # patches
            ],
        ),
        # Recurrent state updated in place: h_cur -> h_next, c_cur -> c_next.
        input_output_aliases={3: 0, 4: 1},
        compiler_params=pltpu.CompilerParams(
            dimension_semantics=("parallel",)),
    )(wmat, bcol, x_flat, h_flat, c_flat)

    return h_next.reshape(B, CH, H, W), c_next.reshape(B, CH, H, W)


def _reference_forward(x, h_cur, c_cur, weight, bias):
    """Pure-JAX reference matching the PyTorch forward (NCHW, f32)."""
    kh, kw = weight.shape[2], weight.shape[3]
    ph, pw = kh // 2, kw // 2
    combined = jnp.concatenate([x, h_cur], axis=1)
    conv = lax.conv_general_dilated(
        combined, weight, window_strides=(1, 1),
        padding=[(ph, ph), (pw, pw)],
        dimension_numbers=("NCHW", "OIHW", "NCHW"),
        precision=lax.Precision.HIGHEST,
    ) + bias[None, :, None, None]
    i, f, o, g = jnp.split(conv, 4, axis=1)
    i, f, o, g = (jax.nn.sigmoid(i), jax.nn.sigmoid(f),
                  jax.nn.sigmoid(o), jnp.tanh(g))
    c_next = f * c_cur + i * g
    h_next = o * jnp.tanh(c_next)
    return h_next, c_next


if __name__ == "__main__":
    # Small deterministic config: batch=2, in_channels=4, hidden_channels=8,
    # spatial 16x16, kernel_size=(3, 3), bias=True, layer_norm=False, dropout=0.
    B, CIN, CH, H, W = 2, 4, 8, 16, 16
    KH, KW = 3, 3
    CT = CIN + CH

    key = jax.random.PRNGKey(0)
    kx, kh_, kc, kw_, kb = jax.random.split(key, 5)
    x = jax.random.normal(kx, (B, CIN, H, W), jnp.float32)
    h0 = jax.random.normal(kh_, (B, CH, H, W), jnp.float32)
    c0 = jax.random.normal(kc, (B, CH, H, W), jnp.float32)
    weight = jax.random.normal(kw_, (4 * CH, CT, KH, KW), jnp.float32) * 0.1
    bias = jax.random.normal(kb, (4 * CH,), jnp.float32) * 0.1

    h_exp, c_exp = _reference_forward(x, h0, c0, weight, bias)

    # Full-precision matmul path: tight correctness check.
    wmat32, bcol32 = prepare_conv_lstm_params(weight, bias,
                                              matmul_dtype=jnp.float32)
    h32, c32 = conv_lstm_cell_forward(x, h0, c0, wmat32, bcol32,
                                      kernel_size=(KH, KW),
                                      matmul_dtype=jnp.float32)
    jax.block_until_ready((h32, c32))
    assert h32.shape == (B, CH, H, W) and c32.shape == (B, CH, H, W)
    assert jnp.allclose(h32, h_exp, atol=1e-4, rtol=1e-4)
    assert jnp.allclose(c32, c_exp, atol=1e-4, rtol=1e-4)

    # Default fast path: bf16 MXU operands, f32 accumulation / gate math.
    wmat, bcol = prepare_conv_lstm_params(weight, bias)        # once per layer
    h_next, c_next = conv_lstm_cell_forward(x, h0, c0, wmat, bcol,
                                            kernel_size=(KH, KW))
    jax.block_until_ready((h_next, c_next))
    assert h_next.shape == (B, CH, H, W) and c_next.shape == (B, CH, H, W)
    assert jnp.allclose(h_next, h_exp, atol=5e-2, rtol=5e-2)
    assert jnp.allclose(c_next, c_exp, atol=5e-2, rtol=5e-2)

    print("KERNEL_OK")
</pallas_src>

<mosaic_0001>
module attributes {stable_mosaic.version = 11 : i64} {
  func.func @_convlstm_kernel(%arg0: i32, %arg1: memref<32x144xf32, #tpu.memory_space<vmem>>, %arg2: memref<32x1xf32, #tpu.memory_space<vmem>>, %arg3: memref<2x4x256xf32, #tpu.memory_space<vmem>>, %arg4: memref<2x8x256xf32, #tpu.memory_space<vmem>>, %arg5: memref<2x8x256xf32, #tpu.memory_space<vmem>>, %arg6: memref<2x8x256xf32, #tpu.memory_space<vmem>>, %arg7: memref<2x8x256xf32, #tpu.memory_space<vmem>>, %arg8: memref<2x16x512xf32, #tpu.memory_space<vmem>>, %arg9: memref<144x512xf32, #tpu.memory_space<vmem>>) attributes {dimension_semantics = [#tpu.dimension_semantics<parallel>], iteration_bounds = array<i64: 1>, scalar_prefetch = 0 : i64, scratch_operands = 2 : i64, tpu.core_type = #tpu.core_type<tc>, window_params = [{pipeline_mode = #tpu.pipeline_mode<synchronous>, transform_indices = @transform_0, window_bounds = array<i64: 32, 144>}, {pipeline_mode = #tpu.pipeline_mode<synchronous>, transform_indices = @transform_1, window_bounds = array<i64: 32, 1>}, {transform_indices = @transform_2, window_bounds = array<i64: 2, 4, 256>}, {transform_indices = @transform_3, window_bounds = array<i64: 2, 8, 256>}, {transform_indices = @transform_4, window_bounds = array<i64: 2, 8, 256>}, {transform_indices = @transform_5, window_bounds = array<i64: 2, 8, 256>}, {transform_indices = @transform_6, window_bounds = array<i64: 2, 8, 256>}]} {
    %cst = arith.constant 0.000000e+00 : f32
    %0 = vector.broadcast %cst : f32 to vector<2x16x512xf32>
    %c0 = arith.constant 0 : index
    %c0_0 = arith.constant 0 : index
    %c0_1 = arith.constant 0 : index
    %1 = vector.load %arg8[%c0, %c0_0, %c0_1] : memref<2x16x512xf32, #tpu.memory_space<vmem>>, vector<2x16x512xf32>
    tpu.vector_store %arg8[%c0, %c0_0, %c0_1], %0 {strides = array<i32>} : memref<2x16x512xf32, #tpu.memory_space<vmem>>, vector<2x16x512xf32>,
    %c0_2 = arith.constant 0 : index
    %c0_3 = arith.constant 0 : index
    %c0_4 = arith.constant 0 : index
    %2 = vector.load %arg3[%c0_2, %c0_3, %c0_4] : memref<2x4x256xf32, #tpu.memory_space<vmem>>, vector<1x4x256xf32>
    %3 = vector.shape_cast %2 : vector<1x4x256xf32> to vector<4x256xf32>
    %c0_5 = arith.constant 0 : index
    %c0_6 = arith.constant 0 : index
    %c128 = arith.constant 128 : index
    %4 = vector.load %arg8[%c0_5, %c0_6, %c128] : memref<2x16x512xf32, #tpu.memory_space<vmem>>, vector<1x4x256xf32>
    %5 = vector.shape_cast %4 : vector<1x4x256xf32> to vector<4x256xf32>
    %6 = vector.shape_cast %3 : vector<4x256xf32> to vector<1x4x256xf32>
    tpu.vector_store %arg8[%c0_5, %c0_6, %c128], %6 {strides = array<i32>} : memref<2x16x512xf32, #tpu.memory_space<vmem>>, vector<1x4x256xf32>,
    %c0_7 = arith.constant 0 : index
    %c0_8 = arith.constant 0 : index
    %c0_9 = arith.constant 0 : index
    %7 = vector.load %arg4[%c0_7, %c0_8, %c0_9] : memref<2x8x256xf32, #tpu.memory_space<vmem>>, vector<1x8x256xf32>
    %8 = vector.shape_cast %7 : vector<1x8x256xf32> to vector<8x256xf32>
    %c0_10 = arith.constant 0 : index
    %c4 = arith.constant 4 : index
    %c128_11 = arith.constant 128 : index
    %9 = vector.load %arg8[%c0_10, %c4, %c128_11] : memref<2x16x512xf32, #tpu.memory_space<vmem>>, vector<1x8x256xf32>
    %10 = vector.shape_cast %9 : vector<1x8x256xf32> to vector<8x256xf32>
    %11 = vector.shape_cast %8 : vector<8x256xf32> to vector<1x8x256xf32>
    tpu.vector_store %arg8[%c0_10, %c4, %c128_11], %11 {strides = array<i32>} : memref<2x16x512xf32, #tpu.memory_space<vmem>>, vector<1x8x256xf32>,
    %c1 = arith.constant 1 : index
    %c0_12 = arith.constant 0 : index
    %c0_13 = arith.constant 0 : index
    %12 = vector.load %arg3[%c1, %c0_12, %c0_13] : memref<2x4x256xf32, #tpu.memory_space<vmem>>, vector<1x4x256xf32>
    %13 = vector.shape_cast %12 : vector<1x4x256xf32> to vector<4x256xf32>
    %c1_14 = arith.constant 1 : index
    %c0_15 = arith.constant 0 : index
    %c128_16 = arith.constant 128 : index
    %14 = vector.load %arg8[%c1_14, %c0_15, %c128_16] : memref<2x16x512xf32, #tpu.memory_space<vmem>>, vector<1x4x256xf32>
    %15 = vector.shape_cast %14 : vector<1x4x256xf32> to vector<4x256xf32>
    %16 = vector.shape_cast %13 : vector<4x256xf32> to vector<1x4x256xf32>
    tpu.vector_store %arg8[%c1_14, %c0_15, %c128_16], %16 {strides = array<i32>} : memref<2x16x512xf32, #tpu.memory_space<vmem>>, vector<1x4x256xf32>,
    %c1_17 = arith.constant 1 : index
    %c0_18 = arith.constant 0 : index
    %c0_19 = arith.constant 0 : index
    %17 = vector.load %arg4[%c1_17, %c0_18, %c0_19] : memref<2x8x256xf32, #tpu.memory_space<vmem>>, vector<1x8x256xf32>
    %18 = vector.shape_cast %17 : vector<1x8x256xf32> to vector<8x256xf32>
    %c1_20 = arith.constant 1 : index
    %c4_21 = arith.constant 4 : index
    %c128_22 = arith.constant 128 : index
    %19 = vector.load %arg8[%c1_20, %c4_21, %c128_22] : memref<2x16x512xf32, #tpu.memory_space<vmem>>, vector<1x8x256xf32>
    %20 = vector.shape_cast %19 : vector<1x8x256xf32> to vector<8x256xf32>
    %21 = vector.shape_cast %18 : vector<8x256xf32> to vector<1x8x256xf32>
    tpu.vector_store %arg8[%c1_20, %c4_21, %c128_22], %21 {strides = array<i32>} : memref<2x16x512xf32, #tpu.memory_space<vmem>>, vector<1x8x256xf32>,
    %22 = tpu.iota {dimensions = array<i32: 1>} : vector<1x512xi32>
    %c16_i32 = arith.constant 16 : i32
    %c0_i32 = arith.constant 0 : i32
    %23 = arith.cmpi eq, %c16_i32, %c0_i32 : i32
    %c1_i32 = arith.constant 1 : i32
    %24 = arith.select %23, %c1_i32, %c16_i32 : i32
    %25 = vector.broadcast %24 : i32 to vector<1x512xi32>
    %26 = arith.remsi %22, %25 : vector<1x512xi32>
    %c0_i32_23 = arith.constant 0 : i32
    %27 = vector.broadcast %c0_i32_23 : i32 to vector<1x512xi32>
    %28 = arith.cmpi ne, %26, %27 : vector<1x512xi32>
    %c0_i32_24 = arith.constant 0 : i32
    %29 = vector.broadcast %c0_i32_24 : i32 to vector<1x512xi32>
    %30 = arith.cmpi slt, %26, %29 : vector<1x512xi32>
    %c0_i32_25 = arith.constant 0 : i32
    %31 = arith.cmpi slt, %24, %c0_i32_25 : i32
    %32 = vector.broadcast %31 : i1 to vector<1x512xi1>
    %33 = vector.broadcast %32 : vector<1x512xi1> to vector<1x512xi1>
    %34 = arith.xori %30, %33 : vector<1x512xi1>
    %35 = arith.andi %34, %28 : vector<1x512xi1>
    %36 = vector.broadcast %24 : i32 to vector<1x512xi32>
    %37 = arith.addi %26, %36 : vector<1x512xi32>
    %38 = arith.select %35, %37, %26 : vector<1x512xi1>, vector<1x512xi32>
    %c1_i32_26 = arith.constant 1 : i32
    %39 = vector.broadcast %c1_i32_26 : i32 to vector<1x512xi32>
    %40 = arith.cmpi sge, %38, %39 : vector<1x512xi32>
    %c16_i32_27 = arith.constant 16 : i32
    %41 = vector.broadcast %c16_i32_27 : i32 to vector<1x512xi32>
    %42 = arith.cmpi sle, %38, %41 : vector<1x512xi32>
    %43 = arith.andi %40, %42 : vector<1x512xi1>
    %c-1_i32 = arith.constant -1 : i32
    %44 = vector.broadcast %c-1_i32 : i32 to vector<1x512xi32>
    %45 = arith.cmpi sge, %38, %44 : vector<1x512xi32>
    %c14_i32 = arith.constant 14 : i32
    %46 = vector.broadcast %c14_i32 : i32 to vector<1x512xi32>
    %47 = arith.cmpi sle, %38, %46 : vector<1x512xi32>
    %48 = arith.andi %45, %47 : vector<1x512xi1>
    %c0_28 = arith.constant 0 : index
    %c0_29 = arith.constant 0 : index
    %c111 = arith.constant 111 : index
    %49 = vector.load %arg8[%c0_28, %c0_29, %c111] : memref<2x16x512xf32, #tpu.memory_space<vmem>>, vector<1x16x256xf32>
    %50 = vector.shape_cast %49 : vector<1x16x256xf32> to vector<16x256xf32>
    %c1_30 = arith.constant 1 : index
    %c0_31 = arith.constant 0 : index
    %c111_32 = arith.constant 111 : index
    %51 = vector.load %arg8[%c1_30, %c0_31, %c111_32] : memref<2x16x512xf32, #tpu.memory_space<vmem>>, vector<1x16x256xf32>
    %52 = vector.shape_cast %51 : vector<1x16x256xf32> to vector<16x256xf32>
    %53 = tpu.concatenate %50, %52 in 1 : vector<16x256xf32>, vector<16x256xf32> -> vector<16x512xf32>
    %cst_33 = arith.constant 0.000000e+00 : f32
    %54 = vector.broadcast %cst_33 : f32 to vector<16x512xf32>
    %55 = vector.shape_cast %43 : vector<1x512xi1> to vector<1x512xi1>
    %56 = vector.broadcast %55 : vector<1x512xi1> to vector<16x512xi1>
    %57 = arith.select %56, %53, %54 : vector<16x512xi1>, vector<16x512xf32>
    %c0_34 = arith.constant 0 : index
    %c0_35 = arith.constant 0 : index
    %58 = vector.load %arg9[%c0_34, %c0_35] : memref<144x512xf32, #tpu.memory_space<vmem>>, vector<16x512xf32>
    tpu.vector_store %arg9[%c0_34, %c0_35], %57 {strides = array<i32>} : memref<144x512xf32, #tpu.memory_space<vmem>>, vector<16x512xf32>,
    %c0_36 = arith.constant 0 : index
    %c0_37 = arith.constant 0 : index
    %c112 = arith.constant 112 : index
    %59 = vector.load %arg8[%c0_36, %c0_37, %c112] : memref<2x16x512xf32, #tpu.memory_space<vmem>>, vector<1x16x256xf32>
    %60 = vector.shape_cast %59 : vector<1x16x256xf32> to vector<16x256xf32>
    %c1_38 = arith.constant 1 : index
    %c0_39 = arith.constant 0 : index
    %c112_40 = arith.constant 112 : index
    %61 = vector.load %arg8[%c1_38, %c0_39, %c112_40] : memref<2x16x512xf32, #tpu.memory_space<vmem>>, vector<1x16x256xf32>
    %62 = vector.shape_cast %61 : vector<1x16x256xf32> to vector<16x256xf32>
    %63 = tpu.concatenate %60, %62 in 1 : vector<16x256xf32>, vector<16x256xf32> -> vector<16x512xf32>
    %c16 = arith.constant 16 : index
    %c0_41 = arith.constant 0 : index
    %64 = vector.load %arg9[%c16, %c0_41] : memref<144x512xf32, #tpu.memory_space<vmem>>, vector<16x512xf32>
    tpu.vector_store %arg9[%c16, %c0_41], %63 {strides = array<i32>} : memref<144x512xf32, #tpu.memory_space<vmem>>, vector<16x512xf32>,
    %c0_42 = arith.constant 0 : index
    %c0_43 = arith.constant 0 : index
    %c113 = arith.constant 113 : index
    %65 = vector.load %arg8[%c0_42, %c0_43, %c113] : memref<2x16x512xf32, #tpu.memory_space<vmem>>, vector<1x16x256xf32>
    %66 = vector.shape_cast %65 : vector<1x16x256xf32> to vector<16x256xf32>
    %c1_44 = arith.constant 1 : index
    %c0_45 = arith.constant 0 : index
    %c113_46 = arith.constant 113 : index
    %67 = vector.load %arg8[%c1_44, %c0_45, %c113_46] : memref<2x16x512xf32, #tpu.memory_space<vmem>>, vector<1x16x256xf32>
    %68 = vector.shape_cast %67 : vector<1x16x256xf32> to vector<16x256xf32>
    %69 = tpu.concatenate %66, %68 in 1 : vector<16x256xf32>, vector<16x256xf32> -> vector<16x512xf32>
    %cst_47 = arith.constant 0.000000e+00 : f32
    %70 = vector.broadcast %cst_47 : f32 to vector<16x512xf32>
    %71 = vector.shape_cast %48 : vector<1x512xi1> to vector<1x512xi1>
    %72 = vector.broadcast %71 : vector<1x512xi1> to vector<16x512xi1>
    %73 = arith.select %72, %69, %70 : vector<16x512xi1>, vector<16x512xf32>
    %c32 = arith.constant 32 : index
    %c0_48 = arith.constant 0 : index
    %74 = vector.load %arg9[%c32, %c0_48] : memref<144x512xf32, #tpu.memory_space<vmem>>, vector<16x512xf32>
    tpu.vector_store %arg9[%c32, %c0_48], %73 {strides = array<i32>} : memref<144x512xf32, #tpu.memory_space<vmem>>, vector<16x512xf32>,
    %c0_49 = arith.constant 0 : index
    %c0_50 = arith.constant 0 : index
    %c127 = arith.constant 127 : index
    %75 = vector.load %arg8[%c0_49, %c0_50, %c127] : memref<2x16x512xf32, #tpu.memory_space<vmem>>, vector<1x16x256xf32>
    %76 = vector.shape_cast %75 : vector<1x16x256xf32> to vector<16x256xf32>
    %c1_51 = arith.constant 1 : index
    %c0_52 = arith.constant 0 : index
    %c127_53 = arith.constant 127 : index
    %77 = vector.load %arg8[%c1_51, %c0_52, %c127_53] : memref<2x16x512xf32, #tpu.memory_space<vmem>>, vector<1x16x256xf32>
    %78 = vector.shape_cast %77 : vector<1x16x256xf32> to vector<16x256xf32>
    %79 = tpu.concatenate %76, %78 in 1 : vector<16x256xf32>, vector<16x256xf32> -> vector<16x512xf32>
    %cst_54 = arith.constant 0.000000e+00 : f32
    %80 = vector.broadcast %cst_54 : f32 to vector<16x512xf32>
    %81 = vector.shape_cast %43 : vector<1x512xi1> to vector<1x512xi1>
    %82 = vector.broadcast %81 : vector<1x512xi1> to vector<16x512xi1>
    %83 = arith.select %82, %79, %80 : vector<16x512xi1>, vector<16x512xf32>
    %c48 = arith.constant 48 : index
    %c0_55 = arith.constant 0 : index
    %84 = vector.load %arg9[%c48, %c0_55] : memref<144x512xf32, #tpu.memory_space<vmem>>, vector<16x512xf32>
    tpu.vector_store %arg9[%c48, %c0_55], %83 {strides = array<i32>} : memref<144x512xf32, #tpu.memory_space<vmem>>, vector<16x512xf32>,
    %c0_56 = arith.constant 0 : index
    %c0_57 = arith.constant 0 : index
    %c128_58 = arith.constant 128 : index
    %85 = vector.load %arg8[%c0_56, %c0_57, %c128_58] : memref<2x16x512xf32, #tpu.memory_space<vmem>>, vector<1x16x256xf32>
    %86 = vector.shape_cast %85 : vector<1x16x256xf32> to vector<16x256xf32>
    %c1_59 = arith.constant 1 : index
    %c0_60 = arith.constant 0 : index
    %c128_61 = arith.constant 128 : index
    %87 = vector.load %arg8[%c1_59, %c0_60, %c128_61] : memref<2x16x512xf32, #tpu.memory_space<vmem>>, vector<1x16x256xf32>
    %88 = vector.shape_cast %87 : vector<1x16x256xf32> to vector<16x256xf32>
    %89 = tpu.concatenate %86, %88 in 1 : vector<16x256xf32>, vector<16x256xf32> -> vector<16x512xf32>
    %c64 = arith.constant 64 : index
    %c0_62 = arith.constant 0 : index
    %90 = vector.load %arg9[%c64, %c0_62] : memref<144x512xf32, #tpu.memory_space<vmem>>, vector<16x512xf32>
    tpu.vector_store %arg9[%c64, %c0_62], %89 {strides = array<i32>} : memref<144x512xf32, #tpu.memory_space<vmem>>, vector<16x512xf32>,
    %c0_63 = arith.constant 0 : index
    %c0_64 = arith.constant 0 : index
    %c129 = arith.constant 129 : index
    %91 = vector.load %arg8[%c0_63, %c0_64, %c129] : memref<2x16x512xf32, #tpu.memory_space<vmem>>, vector<1x16x256xf32>
    %92 = vector.shape_cast %91 : vector<1x16x256xf32> to vector<16x256xf32>
    %c1_65 = arith.constant 1 : index
    %c0_66 = arith.constant 0 : index
    %c129_67 = arith.constant 129 : index
    %93 = vector.load %arg8[%c1_65, %c0_66, %c129_67] : memref<2x16x512xf32, #tpu.memory_space<vmem>>, vector<1x16x256xf32>
    %94 = vector.shape_cast %93 : vector<1x16x256xf32> to vector<16x256xf32>
    %95 = tpu.concatenate %92, %94 in 1 : vector<16x256xf32>, vector<16x256xf32> -> vector<16x512xf32>
    %cst_68 = arith.constant 0.000000e+00 : f32
    %96 = vector.broadcast %cst_68 : f32 to vector<16x512xf32>
    %97 = vector.shape_cast %48 : vector<1x512xi1> to vector<1x512xi1>
    %98 = vector.broadcast %97 : vector<1x512xi1> to vector<16x512xi1>
    %99 = arith.select %98, %95, %96 : vector<16x512xi1>, vector<16x512xf32>
    %c80 = arith.constant 80 : index
    %c0_69 = arith.constant 0 : index
    %100 = vector.load %arg9[%c80, %c0_69] : memref<144x512xf32, #tpu.memory_space<vmem>>, vector<16x512xf32>
    tpu.vector_store %arg9[%c80, %c0_69], %99 {strides = array<i32>} : memref<144x512xf32, #tpu.memory_space<vmem>>, vector<16x512xf32>,
    %c0_70 = arith.constant 0 : index
    %c0_71 = arith.constant 0 : index
    %c143 = arith.constant 143 : index
    %101 = vector.load %arg8[%c0_70, %c0_71, %c143] : memref<2x16x512xf32, #tpu.memory_space<vmem>>, vector<1x16x256xf32>
    %102 = vector.shape_cast %101 : vector<1x16x256xf32> to vector<16x256xf32>
    %c1_72 = arith.constant 1 : index
    %c0_73 = arith.constant 0 : index
    %c143_74 = arith.constant 143 : index
    %103 = vector.load %arg8[%c1_72, %c0_73, %c143_74] : memref<2x16x512xf32, #tpu.memory_space<vmem>>, vector<1x16x256xf32>
    %104 = vector.shape_cast %103 : vector<1x16x256xf32> to vector<16x256xf32>
    %105 = tpu.concatenate %102, %104 in 1 : vector<16x256xf32>, vector<16x256xf32> -> vector<16x512xf32>
    %cst_75 = arith.constant 0.000000e+00 : f32
    %106 = vector.broadcast %cst_75 : f32 to vector<16x512xf32>
    %107 = vector.shape_cast %43 : vector<1x512xi1> to vector<1x512xi1>
    %108 = vector.broadcast %107 : vector<1x512xi1> to vector<16x512xi1>
    %109 = arith.select %108, %105, %106 : vector<16x512xi1>, vector<16x512xf32>
    %c96 = arith.constant 96 : index
    %c0_76 = arith.constant 0 : index
    %110 = vector.load %arg9[%c96, %c0_76] : memref<144x512xf32, #tpu.memory_space<vmem>>, vector<16x512xf32>
    tpu.vector_store %arg9[%c96, %c0_76], %109 {strides = array<i32>} : memref<144x512xf32, #tpu.memory_space<vmem>>, vector<16x512xf32>,
    %c0_77 = arith.constant 0 : index
    %c0_78 = arith.constant 0 : index
    %c144 = arith.constant 144 : index
    %111 = vector.load %arg8[%c0_77, %c0_78, %c144] : memref<2x16x512xf32, #tpu.memory_space<vmem>>, vector<1x16x256xf32>
    %112 = vector.shape_cast %111 : vector<1x16x256xf32> to vector<16x256xf32>
    %c1_79 = arith.constant 1 : index
    %c0_80 = arith.constant 0 : index
    %c144_81 = arith.constant 144 : index
    %113 = vector.load %arg8[%c1_79, %c0_80, %c144_81] : memref<2x16x512xf32, #tpu.memory_space<vmem>>, vector<1x16x256xf32>
    %114 = vector.shape_cast %113 : vector<1x16x256xf32> to vector<16x256xf32>
    %115 = tpu.concatenate %112, %114 in 1 : vector<16x256xf32>, vector<16x256xf32> -> vector<16x512xf32>
    %c112_82 = arith.constant 112 : index
    %c0_83 = arith.constant 0 : index
    %116 = vector.load %arg9[%c112_82, %c0_83] : memref<144x512xf32, #tpu.memory_space<vmem>>, vector<16x512xf32>
    tpu.vector_store %arg9[%c112_82, %c0_83], %115 {strides = array<i32>} : memref<144x512xf32, #tpu.memory_space<vmem>>, vector<16x512xf32>,
    %c0_84 = arith.constant 0 : index
    %c0_85 = arith.constant 0 : index
    %c145 = arith.constant 145 : index
    %117 = vector.load %arg8[%c0_84, %c0_85, %c145] : memref<2x16x512xf32, #tpu.memory_space<vmem>>, vector<1x16x256xf32>
    %118 = vector.shape_cast %117 : vector<1x16x256xf32> to vector<16x256xf32>
    %c1_86 = arith.constant 1 : index
    %c0_87 = arith.constant 0 : index
    %c145_88 = arith.constant 145 : index
    %119 = vector.load %arg8[%c1_86, %c0_87, %c145_88] : memref<2x16x512xf32, #tpu.memory_space<vmem>>, vector<1x16x256xf32>
    %120 = vector.shape_cast %119 : vector<1x16x256xf32> to vector<16x256xf32>
    %121 = tpu.concatenate %118, %120 in 1 : vector<16x256xf32>, vector<16x256xf32> -> vector<16x512xf32>
    %cst_89 = arith.constant 0.000000e+00 : f32
    %122 = vector.broadcast %cst_89 : f32 to vector<16x512xf32>
    %123 = vector.shape_cast %48 : vector<1x512xi1> to vector<1x512xi1>
    %124 = vector.broadcast %123 : vector<1x512xi1> to vector<16x512xi1>
    %125 = arith.select %124, %121, %122 : vector<16x512xi1>, vector<16x512xf32>
    %c128_90 = arith.constant 128 : index
    %c0_91 = arith.constant 0 : index
    %126 = vector.load %arg9[%c128_90, %c0_91] : memref<144x512xf32, #tpu.memory_space<vmem>>, vector<16x512xf32>
    tpu.vector_store %arg9[%c128_90, %c0_91], %125 {strides = array<i32>} : memref<144x512xf32, #tpu.memory_space<vmem>>, vector<16x512xf32>,
    %c0_92 = arith.constant 0 : index
    %c0_93 = arith.constant 0 : index
    %127 = vector.load %arg1[%c0_92, %c0_93] : memref<32x144xf32, #tpu.memory_space<vmem>>, vector<32x144xf32>
    %c0_94 = arith.constant 0 : index
    %c0_95 = arith.constant 0 : index
    %128 = vector.load %arg9[%c0_94, %c0_95] : memref<144x512xf32, #tpu.memory_space<vmem>>, vector<144x512xf32>
    %cst_96 = arith.constant dense<0.000000e+00> : vector<32x512xf32>
    %129 = tpu.matmul %127, %128, %cst_96 {dimension_numbers = #tpu.dot_dimension_numbers<[1], [0], [0], [1], [0, 0, 1, 1], [], []>} : vector<32x144xf32>, vector<144x512xf32>, vector<32x512xf32> -> vector<32x512xf32>
    %c0_97 = arith.constant 0 : index
    %c0_98 = arith.constant 0 : index
    %130 = vector.load %arg2[%c0_97, %c0_98] : memref<32x1xf32, #tpu.memory_space<vmem>>, vector<32x1xf32>
    %131 = vector.broadcast %130 : vector<32x1xf32> to vector<32x512xf32>
    %132 = arith.addf %129, %131 : vector<32x512xf32>
    %133 = vector.extract_strided_slice %132 {offsets = [0, 0], sizes = [24, 512], strides = [1, 1]} : vector<32x512xf32> to vector<24x512xf32>
    %cst_99 = arith.constant 5.000000e-01 : f32
    %134 = vector.broadcast %cst_99 : f32 to vector<24x512xf32>
    %135 = arith.mulf %134, %133 : vector<24x512xf32>
    %136 = math.tanh %135 : vector<24x512xf32>
    %cst_100 = arith.constant 5.000000e-01 : f32
    %137 = vector.broadcast %cst_100 : f32 to vector<24x512xf32>
    %138 = arith.mulf %137, %136 : vector<24x512xf32>
    %cst_101 = arith.constant 5.000000e-01 : f32
    %139 = vector.broadcast %cst_101 : f32 to vector<24x512xf32>
    %140 = arith.addf %139, %138 : vector<24x512xf32>
    %141 = vector.extract_strided_slice %132 {offsets = [24, 0], sizes = [8, 512], strides = [1, 1]} : vector<32x512xf32> to vector<8x512xf32>
    %142 = math.tanh %141 : vector<8x512xf32>
    %143 = vector.extract_strided_slice %140 {offsets = [0, 0], sizes = [8, 512], strides = [1, 1]} : vector<24x512xf32> to vector<8x512xf32>
    %144 = vector.extract_strided_slice %140 {offsets = [8, 0], sizes = [8, 512], strides = [1, 1]} : vector<24x512xf32> to vector<8x512xf32>
    %145 = vector.extract_strided_slice %140 {offsets = [16, 0], sizes = [8, 512], strides = [1, 1]} : vector<24x512xf32> to vector<8x512xf32>
    %c0_102 = arith.constant 0 : index
    %c0_103 = arith.constant 0 : index
    %c0_104 = arith.constant 0 : index
    %146 = vector.load %arg5[%c0_102, %c0_103, %c0_104] : memref<2x8x256xf32, #tpu.memory_space<vmem>>, vector<1x8x256xf32>
    %147 = vector.shape_cast %146 : vector<1x8x256xf32> to vector<8x256xf32>
    %148 = vector.extract_strided_slice %144 {offsets = [0, 0], sizes = [8, 256], strides = [1, 1]} : vector<8x512xf32> to vector<8x256xf32>
    %149 = arith.mulf %148, %147 : vector<8x256xf32>
    %150 = vector.extract_strided_slice %143 {offsets = [0, 0], sizes = [8, 256], strides = [1, 1]} : vector<8x512xf32> to vector<8x256xf32>
    %151 = vector.extract_strided_slice %142 {offsets = [0, 0], sizes = [8, 256], strides = [1, 1]} : vector<8x512xf32> to vector<8x256xf32>
    %152 = arith.mulf %150, %151 : vector<8x256xf32>
    %153 = arith.addf %149, %152 : vector<8x256xf32>
    %154 = vector.extract_strided_slice %145 {offsets = [0, 0], sizes = [8, 256], strides = [1, 1]} : vector<8x512xf32> to vector<8x256xf32>
    %155 = math.tanh %153 : vector<8x256xf32>
    %156 = arith.mulf %154, %155 : vector<8x256xf32>
    %c0_105 = arith.constant 0 : index
    %c0_106 = arith.constant 0 : index
    %c0_107 = arith.constant 0 : index
    %157 = vector.load %arg7[%c0_105, %c0_106, %c0_107] : memref<2x8x256xf32, #tpu.memory_space<vmem>>, vector<1x8x256xf32>
    %158 = vector.shape_cast %157 : vector<1x8x256xf32> to vector<8x256xf32>
    %159 = vector.shape_cast %153 : vector<8x256xf32> to vector<1x8x256xf32>
    tpu.vector_store %arg7[%c0_105, %c0_106, %c0_107], %159 {strides = array<i32>} : memref<2x8x256xf32, #tpu.memory_space<vmem>>, vector<1x8x256xf32>,
    %c0_108 = arith.constant 0 : index
    %c0_109 = arith.constant 0 : index
    %c0_110 = arith.constant 0 : index
    %160 = vector.load %arg6[%c0_108, %c0_109, %c0_110] : memref<2x8x256xf32, #tpu.memory_space<vmem>>, vector<1x8x256xf32>
    %161 = vector.shape_cast %160 : vector<1x8x256xf32> to vector<8x256xf32>
    %162 = vector.shape_cast %156 : vector<8x256xf32> to vector<1x8x256xf32>
    tpu.vector_store %arg6[%c0_108, %c0_109, %c0_110], %162 {strides = array<i32>} : memref<2x8x256xf32, #tpu.memory_space<vmem>>, vector<1x8x256xf32>,
    %c1_111 = arith.constant 1 : index
    %c0_112 = arith.constant 0 : index
    %c0_113 = arith.constant 0 : index
    %163 = vector.load %arg5[%c1_111, %c0_112, %c0_113] : memref<2x8x256xf32, #tpu.memory_space<vmem>>, vector<1x8x256xf32>
    %164 = vector.shape_cast %163 : vector<1x8x256xf32> to vector<8x256xf32>
    %165 = vector.extract_strided_slice %144 {offsets = [0, 256], sizes = [8, 256], strides = [1, 1]} : vector<8x512xf32> to vector<8x256xf32>
    %166 = arith.mulf %165, %164 : vector<8x256xf32>
    %167 = vector.extract_strided_slice %143 {offsets = [0, 256], sizes = [8, 256], strides = [1, 1]} : vector<8x512xf32> to vector<8x256xf32>
    %168 = vector.extract_strided_slice %142 {offsets = [0, 256], sizes = [8, 256], strides = [1, 1]} : vector<8x512xf32> to vector<8x256xf32>
    %169 = arith.mulf %167, %168 : vector<8x256xf32>
    %170 = arith.addf %166, %169 : vector<8x256xf32>
    %171 = vector.extract_strided_slice %145 {offsets = [0, 256], sizes = [8, 256], strides = [1, 1]} : vector<8x512xf32> to vector<8x256xf32>
    %172 = math.tanh %170 : vector<8x256xf32>
    %173 = arith.mulf %171, %172 : vector<8x256xf32>
    %c1_114 = arith.constant 1 : index
    %c0_115 = arith.constant 0 : index
    %c0_116 = arith.constant 0 : index
    %174 = vector.load %arg7[%c1_114, %c0_115, %c0_116] : memref<2x8x256xf32, #tpu.memory_space<vmem>>, vector<1x8x256xf32>
    %175 = vector.shape_cast %174 : vector<1x8x256xf32> to vector<8x256xf32>
    %176 = vector.shape_cast %170 : vector<8x256xf32> to vector<1x8x256xf32>
    tpu.vector_store %arg7[%c1_114, %c0_115, %c0_116], %176 {strides = array<i32>} : memref<2x8x256xf32, #tpu.memory_space<vmem>>, vector<1x8x256xf32>,
    %c1_117 = arith.constant 1 : index
    %c0_118 = arith.constant 0 : index
    %c0_119 = arith.constant 0 : index
    %177 = vector.load %arg6[%c1_117, %c0_118, %c0_119] : memref<2x8x256xf32, #tpu.memory_space<vmem>>, vector<1x8x256xf32>
    %178 = vector.shape_cast %177 : vector<1x8x256xf32> to vector<8x256xf32>
    %179 = vector.shape_cast %173 : vector<8x256xf32> to vector<1x8x256xf32>
    tpu.vector_store %arg6[%c1_117, %c0_118, %c0_119], %179 {strides = array<i32>} : memref<2x8x256xf32, #tpu.memory_space<vmem>>, vector<1x8x256xf32>,
    return
  }
  func.func @transform_0(%arg0: i32) -> (i32, i32) {
    %c0_i32 = arith.constant 0 : i32
    %c0_i32_0 = arith.constant 0 : i32
    %c0_i32_1 = arith.constant 0 : i32
    return %c0_i32, %c0_i32_0 : i32, i32
  }
  func.func @transform_1(%arg0: i32) -> (i32, i32) {
    %c0_i32 = arith.constant 0 : i32
    %c0_i32_0 = arith.constant 0 : i32
    %c0_i32_1 = arith.constant 0 : i32
    return %c0_i32, %c0_i32_0 : i32, i32
  }
  func.func @transform_2(%arg0: i32) -> (i32, i32, i32) {
    %c0_i32 = arith.constant 0 : i32
    %c0_i32_0 = arith.constant 0 : i32
    %c0_i32_1 = arith.constant 0 : i32
    return %arg0, %c0_i32, %c0_i32_0 : i32, i32, i32
  }
  func.func @transform_3(%arg0: i32) -> (i32, i32, i32) {
    %c0_i32 = arith.constant 0 : i32
    %c0_i32_0 = arith.constant 0 : i32
    %c0_i32_1 = arith.constant 0 : i32
    return %arg0, %c0_i32, %c0_i32_0 : i32, i32, i32
  }
  func.func @transform_4(%arg0: i32) -> (i32, i32, i32) {
    %c0_i32 = arith.constant 0 : i32
    %c0_i32_0 = arith.constant 0 : i32
    %c0_i32_1 = arith.constant 0 : i32
    return %arg0, %c0_i32, %c0_i32_0 : i32, i32, i32
  }
  func.func @transform_5(%arg0: i32) -> (i32, i32, i32) {
    %c0_i32 = arith.constant 0 : i32
    %c0_i32_0 = arith.constant 0 : i32
    %c0_i32_1 = arith.constant 0 : i32
    return %arg0, %c0_i32, %c0_i32_0 : i32, i32, i32
  }
  func.func @transform_6(%arg0: i32) -> (i32, i32, i32) {
    %c0_i32 = arith.constant 0 : i32
    %c0_i32_0 = arith.constant 0 : i32
    %c0_i32_1 = arith.constant 0 : i32
    return %arg0, %c0_i32, %c0_i32_0 : i32, i32, i32
  }
}

</mosaic_0001>

<llo_original>
// kernel: conv_lstm_cell_forward.1
$region0: #{conv_lstm_cell_forward.1}
  #allocation0 [shape = 'u32[]', space=smem, size = 0x4, offset = 0x4, fixed_abs, tag = 'smem constant byte address 0x4 - core index']
  #allocation1 [shape = 'u32[144,128]{1,0:T(1,128)}', space=vmem, size = 0x12000, scoped, tag = 'internal scratch']
  #allocation2 [shape = 'f32[2,16,512]{2,1,0:T(8,128)}', space=vmem, size = 0x10000, scoped, tag = 'scratch operand']
  #allocation3 [shape = 'f32[144,512]{1,0:T(8,128)}', space=vmem, size = 0x48000, scoped, tag = 'scratch operand']
  %s0 = inlined_call_operand.vmem [shape: f32[32,144], index: 0, kind: input, shape index: {}]
  %s1 = inlined_call_operand.vmem [shape: f32[32,1], index: 1, kind: input, shape index: {}]
  %s2 = inlined_call_operand.vmem [shape: f32[2,4,256], index: 2, kind: input, shape index: {}]
  %s3 = inlined_call_operand.vmem [shape: f32[2,8,256], index: 3, kind: input, shape index: {}, may-alias: {3,5}]
  %s4 = inlined_call_operand.vmem [shape: f32[2,8,256], index: 4, kind: input, shape index: {}, may-alias: {4,6}]
  %s5 = inlined_call_operand.vmem [shape: f32[2,8,256], index: 5, kind: output, shape index: {0}, may-alias: {3,5}]
  %s6 = inlined_call_operand.vmem [shape: f32[2,8,256], index: 6, kind: output, shape index: {1}, may-alias: {4,6}]
  %7 = xla_tuple %s5, %s6
  %s8 = sld [smem:[#allocation0]]
  $region38: #{conv_lstm_cell_forward.1} parent=0
    _
  %s10 = ssub.s32 1, %s8
  %s11 = scalar_select 0, %s10, %s8
  // Predicated region
  $region2: #{conv_lstm_cell_forward.1} parent=0 // pred_check
    _
  $region3: #{conv_lstm_cell_forward.1} parent=0 // pred_check_branch
    %13 = sbr.rel (0) target = $region5
  $region4: #{conv_lstm_cell_forward.1} parent=0 // pred_region
    _
  $region5: #{conv_lstm_cell_forward.1} parent=0 // pred_fallthru
    _
  // Predicated region
  $region6: #{conv_lstm_cell_forward.1} parent=0 // pred_check
    _
  $region7: #{conv_lstm_cell_forward.1} parent=0 // pred_check_branch
    %15 = sbr.rel (0) target = $region9
  $region8: #{conv_lstm_cell_forward.1} parent=0 // pred_region
    _
  $region9: #{conv_lstm_cell_forward.1} parent=0 // pred_fallthru
    _
  // Predicated region
  $region10: #{conv_lstm_cell_forward.1} parent=0 // pred_check
    _
  $region11: #{conv_lstm_cell_forward.1} parent=0 // pred_check_branch
    %17 = sbr.rel (0) target = $region13
  $region12: #{conv_lstm_cell_forward.1} parent=0 // pred_region
    _
  $region13: #{conv_lstm_cell_forward.1} parent=0 // pred_fallthru
    _
  // Predicated region
  $region14: #{conv_lstm_cell_forward.1} parent=0 // pred_check
    _
  $region15: #{conv_lstm_cell_forward.1} parent=0 // pred_check_branch
    %19 = sbr.rel (0) target = $region17
  $region16: #{conv_lstm_cell_forward.1} parent=0 // pred_region
    _
  $region17: #{conv_lstm_cell_forward.1} parent=0 // pred_fallthru
    _
  // Predicated region
  $region18: #{conv_lstm_cell_forward.1} parent=0 // pred_check
    _
  $region19: #{conv_lstm_cell_forward.1} parent=0 // pred_check_branch
    %21 = sbr.rel (0) target = $region21
  $region20: #{conv_lstm_cell_forward.1} parent=0 // pred_region
    _
  $region21: #{conv_lstm_cell_forward.1} parent=0 // pred_fallthru
    _
  %22 = vst [vmem:[#allocation2] sm:$0xff] 0.0
  %23 = vst [vmem:[#allocation2 + $0x8] sm:$0xff] 0.0
  %24 = vst [vmem:[#allocation2 + $0x10] sm:$0xff] 0.0
  %25 = vst [vmem:[#allocation2 + $0x18] sm:$0xff] 0.0
  %26 = vst [vmem:[#allocation2 + $0x20] sm:$0xff] 0.0
  %27 = vst [vmem:[#allocation2 + $0x28] sm:$0xff] 0.0
  %28 = vst [vmem:[#allocation2 + $0x30] sm:$0xff] 0.0
  %29 = vst [vmem:[#allocation2 + $0x38] sm:$0xff] 0.0
  %30 = vst [vmem:[#allocation2 + $0x40] sm:$0xff] 0.0
  %31 = vst [vmem:[#allocation2 + $0x48] sm:$0xff] 0.0
  %32 = vst [vmem:[#allocation2 + $0x50] sm:$0xff] 0.0
  %33 = vst [vmem:[#allocation2 + $0x58] sm:$0xff] 0.0
  %34 = vst [vmem:[#allocation2 + $0x60] sm:$0xff] 0.0
  %35 = vst [vmem:[#allocation2 + $0x68] sm:$0xff] 0.0
  %36 = vst [vmem:[#allocation2 + $0x70] sm:$0xff] 0.0
  %37 = vst [vmem:[#allocation2 + $0x78] sm:$0xff] 0.0
  %v38 = vld [vmem:[%s2] sm:$0xff]
  %v40 = vcombine.high %v38, %v38
  %42 = vst [vmem:[#allocation2 + $0x8] sm:$0xf] %v38
  %43 = vst [vmem:[#allocation2 + $0x10] sm:$0xf] %v40
  %v44 = vld [vmem:[%s3] sm:$0xff]
  %v45 = vld [vmem:[%s3 + $0x8] sm:$0xff]
  %v48 = vrot.slane %v44, 4
  %v49 = vrot.slane %v45, 4
  %52 = vst [vmem:[#allocation2 + $0x8] sm:$0xf0] %v48
  %53 = vst [vmem:[#allocation2 + $0x10] sm:$0xf0] %v49
  %54 = vst [vmem:[#allocation2 + $0x28] sm:$0xf] %v48
  %55 = vst [vmem:[#allocation2 + $0x30] sm:$0xf] %v49
  %s56 = scalar_lea.vmem %s2, 8
  %v57 = vld [vmem:[%s56] sm:$0xff]
  %v59 = vcombine.high %v57, %v57
  %s61 = scalar_lea.vmem [#allocation2], 64
  %62 = vst [vmem:[%s61 + $0x8] sm:$0xf] %v57
  %63 = vst [vmem:[%s61 + $0x10] sm:$0xf] %v59
  %s64 = scalar_lea.vmem %s3, 16
  %v65 = vld [vmem:[%s64] sm:$0xff]
  %v66 = vld [vmem:[%s64 + $0x8] sm:$0xff]
  %v69 = vrot.slane %v65, 4
  %v70 = vrot.slane %v66, 4
  %73 = vst [vmem:[%s61 + $0x8] sm:$0xf0] %v69
  %74 = vst [vmem:[%s61 + $0x10] sm:$0xf0] %v70
  %75 = vst [vmem:[%s61 + $0x28] sm:$0xf] %v69
  %76 = vst [vmem:[%s61 + $0x30] sm:$0xf] %v70
  %v77 = vlaneseq
  %v78 = vand.u32 %v77, 127
  %v79 = vadd.s32 %v78, 128
  %v80 = vadd.s32 %v78, 256
  %v81 = vadd.s32 %v78, 384
  %vm82 = vcmp.lt.s32.totalorder %v78, 0
  %v83 = vsub.s32 0, %v78
  %v84 = vsel %vm82, %v83, %v78
  %v85 = vshrl.u32 %v84, 4
  %v86 = vand.u32 %v84, 15
  %v87 = vsub.s32 0, %v86
  %v88 = vsel %vm82, %v87, %v86
  %vm89 = vcmp.lt.s32.totalorder %v79, 0
  %v90 = vsub.s32 0, %v79
  %v91 = vsel %vm89, %v90, %v79
  %v92 = vshrl.u32 %v91, 4
  %v93 = vand.u32 %v91, 15
  %v94 = vsub.s32 0, %v93
  %v95 = vsel %vm89, %v94, %v93
  %vm96 = vcmp.lt.s32.totalorder %v80, 0
  %v97 = vsub.s32 0, %v80
  %v98 = vsel %vm96, %v97, %v80
  %v99 = vshrl.u32 %v98, 4
  %v100 = vand.u32 %v98, 15
  %v101 = vsub.s32 0, %v100
  %v102 = vsel %vm96, %v101, %v100
  %vm103 = vcmp.lt.s32.totalorder %v81, 0
  %v104 = vsub.s32 0, %v81
  %v105 = vsel %vm103, %v104, %v81
  %v106 = vshrl.u32 %v105, 4
  %v107 = vand.u32 %v105, 15
  %v108 = vsub.s32 0, %v107
  %v109 = vsel %vm103, %v108, %v107
  %vm110 = vcmp.ne.s32.totalorder %v88, 0
  %vm111 = vcmp.ne.s32.totalorder %v95, 0
  %vm112 = vcmp.ne.s32.totalorder %v102, 0
  %vm113 = vcmp.ne.s32.totalorder %v109, 0
  %vm114 = vcmp.lt.s32.totalorder %v88, 0
  %vm115 = vcmp.lt.s32.totalorder %v95, 0
  %vm116 = vcmp.lt.s32.totalorder %v102, 0
  %vm117 = vcmp.lt.s32.totalorder %v109, 0
  %vm118 = vmand %vm114, %vm110
  %vm119 = vmand %vm115, %vm111
  %vm120 = vmand %vm116, %vm112
  %vm121 = vmand %vm117, %vm113
  %v122 = vadd.s32 %v88, 16
  %v123 = vadd.s32 %v95, 16
  %v124 = vadd.s32 %v102, 16
  %v125 = vadd.s32 %v109, 16
  %v126 = vsel %vm118, %v122, %v88
  %v127 = vsel %vm119, %v123, %v95
  %v128 = vsel %vm120, %v124, %v102
  %v129 = vsel %vm121, %v125, %v109
  %vm130 = vcmp.ge.s32.totalorder %v126, 1
  %vm131 = vcmp.ge.s32.totalorder %v127, 1
  %vm132 = vcmp.ge.s32.totalorder %v128, 1
  %vm133 = vcmp.ge.s32.totalorder %v129, 1
  %vm134 = vcmp.le.s32.totalorder %v126, 16
  %vm135 = vcmp.le.s32.totalorder %v127, 16
  %vm136 = vcmp.le.s32.totalorder %v128, 16
  %vm137 = vcmp.le.s32.totalorder %v129, 16
  %vm138 = vmand %vm130, %vm134
  %vm139 = vmand %vm131, %vm135
  %vm140 = vmand %vm132, %vm136
  %vm141 = vmand %vm133, %vm137
  %vm142 = vcmp.ge.s32.totalorder %v126, 4294967295
  %vm143 = vcmp.ge.s32.totalorder %v127, 4294967295
  %vm144 = vcmp.ge.s32.totalorder %v128, 4294967295
  %vm145 = vcmp.ge.s32.totalorder %v129, 4294967295
  %vm146 = vcmp.le.s32.totalorder %v126, 14
  %vm147 = vcmp.le.s32.totalorder %v127, 14
  %vm148 = vcmp.le.s32.totalorder %v128, 14
  %vm149 = vcmp.le.s32.totalorder %v129, 14
  %vm150 = vmand %vm142, %vm146
  %vm151 = vmand %vm143, %vm147
  %vm152 = vmand %vm144, %vm148
  %vm153 = vmand %vm145, %vm149
  %v154 = vld [vmem:[#allocation2] sm:$0xff]
  %v155 = vld [vmem:[#allocation2 + $0x8] sm:$0xff]
  %v156 = vld [vmem:[#allocation2 + $0x10] sm:$0xff]
  %v157 = vld [vmem:[#allocation2 + $0x20] sm:$0xff]
  %v158 = vld [vmem:[#allocation2 + $0x28] sm:$0xff]
  %v159 = vld [vmem:[#allocation2 + $0x30] sm:$0xff]
  %v160 = vld [vmem:[%s61] sm:$0xff]
  %v161 = vld [vmem:[%s61 + $0x8] sm:$0xff]
  %v162 = vld [vmem:[%s61 + $0x10] sm:$0xff]
  %v163 = vld [vmem:[%s61 + $0x20] sm:$0xff]
  %v164 = vld [vmem:[%s61 + $0x28] sm:$0xff]
  %v165 = vld [vmem:[%s61 + $0x30] sm:$0xff]
  %172 = vrot.lane.b32.xlu0 %v154, 17
  %v173 = vpop.permute.xlu0 %172
  %174 = vrot.lane.b32.xlu0 %v155, 17
  %v175 = vpop.permute.xlu0 %174
  %176 = vrot.lane.b32.xlu0 %v156, 17
  %v177 = vpop.permute.xlu0 %176
  %178 = vrot.lane.b32.xlu0 %v157, 17
  %v179 = vpop.permute.xlu0 %178
  %180 = vrot.lane.b32.xlu0 %v158, 17
  %v181 = vpop.permute.xlu0 %180
  %182 = vrot.lane.b32.xlu0 %v159, 17
  %v183 = vpop.permute.xlu0 %182
  %vm184 = vcmask 138240
  %v185 = vsel %vm184, %v173, %v175
  %v186 = vsel %vm184, %v175, %v177
  %v187 = vsel %vm184, %v179, %v181
  %v188 = vsel %vm184, %v181, %v183
  %199 = vrot.lane.b32.xlu0 %v160, 17
  %v200 = vpop.permute.xlu0 %199
  %201 = vrot.lane.b32.xlu0 %v161, 17
  %v202 = vpop.permute.xlu0 %201
  %203 = vrot.lane.b32.xlu0 %v162, 17
  %v204 = vpop.permute.xlu0 %203
  %205 = vrot.lane.b32.xlu0 %v163, 17
  %v206 = vpop.permute.xlu0 %205
  %207 = vrot.lane.b32.xlu0 %v164, 17
  %v208 = vpop.permute.xlu0 %207
  %209 = vrot.lane.b32.xlu0 %v165, 17
  %v210 = vpop.permute.xlu0 %209
  %v211 = vsel %vm184, %v200, %v202
  %v212 = vsel %vm184, %v202, %v204
  %v213 = vsel %vm184, %v206, %v208
  %v214 = vsel %vm184, %v208, %v210
  %v219 = vsel %vm138, 1, 0
  %v220 = vsel %vm139, 1, 0
  %v221 = vsel %vm140, 1, 0
  %v222 = vsel %vm141, 1, 0
  %vm223 = vcmp.eq.s32.totalorder %v219, 1
  %vm224 = vcmp.eq.s32.totalorder %v220, 1
  %vm225 = vcmp.eq.s32.totalorder %v221, 1
  %vm226 = vcmp.eq.s32.totalorder %v222, 1
  %v227 = vsel %vm223, %v185, 0.0
  %v228 = vsel %vm224, %v186, 0.0
  %v229 = vsel %vm225, %v211, 0.0
  %v230 = vsel %vm226, %v212, 0.0
  %v231 = vsel %vm223, %v187, 0.0
  %v232 = vsel %vm224, %v188, 0.0
  %v233 = vsel %vm225, %v213, 0.0
  %v234 = vsel %vm226, %v214, 0.0
  %235 = vst [vmem:[#allocation3] sm:$0xff] %v227
  %236 = vst [vmem:[#allocation3 + $0x8] sm:$0xff] %v228
  %237 = vst [vmem:[#allocation3 + $0x10] sm:$0xff] %v229
  %238 = vst [vmem:[#allocation3 + $0x18] sm:$0xff] %v230
  %239 = vst [vmem:[#allocation3 + $0x20] sm:$0xff] %v231
  %240 = vst [vmem:[#allocation3 + $0x28] sm:$0xff] %v232
  %241 = vst [vmem:[#allocation3 + $0x30] sm:$0xff] %v233
  %242 = vst [vmem:[#allocation3 + $0x38] sm:$0xff] %v234
  %v243 = vld [vmem:[#allocation2] sm:$0xff]
  %v244 = vld [vmem:[#allocation2 + $0x8] sm:$0xff]
  %v245 = vld [vmem:[#allocation2 + $0x10] sm:$0xff]
  %v246 = vld [vmem:[#allocation2 + $0x20] sm:$0xff]
  %v247 = vld [vmem:[#allocation2 + $0x28] sm:$0xff]
  %v248 = vld [vmem:[#allocation2 + $0x30] sm:$0xff]
  %v249 = vld [vmem:[%s61] sm:$0xff]
  %v250 = vld [vmem:[%s61 + $0x8] sm:$0xff]
  %v251 = vld [vmem:[%s61 + $0x10] sm:$0xff]
  %v252 = vld [vmem:[%s61 + $0x20] sm:$0xff]
  %v253 = vld [vmem:[%s61 + $0x28] sm:$0xff]
  %v254 = vld [vmem:[%s61 + $0x30] sm:$0xff]
  %261 = vrot.lane.b32.xlu0 %v243, 16
  %v262 = vpop.permute.xlu0 %261
  %263 = vrot.lane.b32.xlu0 %v244, 16
  %v264 = vpop.permute.xlu0 %263
  %265 = vrot.lane.b32.xlu0 %v245, 16
  %v266 = vpop.permute.xlu0 %265
  %267 = vrot.lane.b32.xlu0 %v246, 16
  %v268 = vpop.permute.xlu0 %267
  %269 = vrot.lane.b32.xlu0 %v247, 16
  %v270 = vpop.permute.xlu0 %269
  %271 = vrot.lane.b32.xlu0 %v248, 16
  %v272 = vpop.permute.xlu0 %271
  %vm273 = vcmask 130048
  %v274 = vsel %vm273, %v262, %v264
  %v275 = vsel %vm273, %v264, %v266
  %v276 = vsel %vm273, %v268, %v270
  %v277 = vsel %vm273, %v270, %v272
  %288 = vrot.lane.b32.xlu0 %v249, 16
  %v289 = vpop.permute.xlu0 %288
  %290 = vrot.lane.b32.xlu0 %v250, 16
  %v291 = vpop.permute.xlu0 %290
  %292 = vrot.lane.b32.xlu0 %v251, 16
  %v293 = vpop.permute.xlu0 %292
  %294 = vrot.lane.b32.xlu0 %v252, 16
  %v295 = vpop.permute.xlu0 %294
  %296 = vrot.lane.b32.xlu0 %v253, 16
  %v297 = vpop.permute.xlu0 %296
  %298 = vrot.lane.b32.xlu0 %v254, 16
  %v299 = vpop.permute.xlu0 %298
  %v300 = vsel %vm273, %v289, %v291
  %v301 = vsel %vm273, %v291, %v293
  %v302 = vsel %vm273, %v295, %v297
  %v303 = vsel %vm273, %v297, %v299
  %308 = vst [vmem:[#allocation3 + $0x40] sm:$0xff] %v274
  %309 = vst [vmem:[#allocation3 + $0x48] sm:$0xff] %v275
  %310 = vst [vmem:[#allocation3 + $0x50] sm:$0xff] %v300
  %311 = vst [vmem:[#allocation3 + $0x58] sm:$0xff] %v301
  %312 = vst [vmem:[#allocation3 + $0x60] sm:$0xff] %v276
  %313 = vst [vmem:[#allocation3 + $0x68] sm:$0xff] %v277
  %314 = vst [vmem:[#allocation3 + $0x70] sm:$0xff] %v302
  %315 = vst [vmem:[#allocation3 + $0x78] sm:$0xff] %v303
  %v316 = vld [vmem:[#allocation2] sm:$0xff]
  %v317 = vld [vmem:[#allocation2 + $0x8] sm:$0xff]
  %v318 = vld [vmem:[#allocation2 + $0x10] sm:$0xff]
  %v319 = vld [vmem:[#allocation2 + $0x20] sm:$0xff]
  %v320 = vld [vmem:[#allocation2 + $0x28] sm:$0xff]
  %v321 = vld [vmem:[#allocation2 + $0x30] sm:$0xff]
  %v322 = vld [vmem:[%s61] sm:$0xff]
  %v323 = vld [vmem:[%s61 + $0x8] sm:$0xff]
  %v324 = vld [vmem:[%s61 + $0x10] sm:$0xff]
  %v325 = vld [vmem:[%s61 + $0x20] sm:$0xff]
  %v326 = vld [vmem:[%s61 + $0x28] sm:$0xff]
  %v327 = vld [vmem:[%s61 + $0x30] sm:$0xff]
  %334 = vrot.lane.b32.xlu0 %v316, 15
  %v335 = vpop.permute.xlu0 %334
  %336 = vrot.lane.b32.xlu0 %v317, 15
  %v337 = vpop.permute.xlu0 %336
  %338 = vrot.lane.b32.xlu0 %v318, 15
  %v339 = vpop.permute.xlu0 %338
  %340 = vrot.lane.b32.xlu0 %v319, 15
  %v341 = vpop.permute.xlu0 %340
  %342 = vrot.lane.b32.xlu0 %v320, 15
  %v343 = vpop.permute.xlu0 %342
  %344 = vrot.lane.b32.xlu0 %v321, 15
  %v345 = vpop.permute.xlu0 %344
  %vm346 = vcmask 121856
  %v347 = vsel %vm346, %v335, %v337
  %v348 = vsel %vm346, %v337, %v339
  %v349 = vsel %vm346, %v341, %v343
  %v350 = vsel %vm346, %v343, %v345
  %361 = vrot.lane.b32.xlu0 %v322, 15
  %v362 = vpop.permute.xlu0 %361
  %363 = vrot.lane.b32.xlu0 %v323, 15
  %v364 = vpop.permute.xlu0 %363
  %365 = vrot.lane.b32.xlu0 %v324, 15
  %v366 = vpop.permute.xlu0 %365
  %367 = vrot.lane.b32.xlu0 %v325, 15
  %v368 = vpop.permute.xlu0 %367
  %369 = vrot.lane.b32.xlu0 %v326, 15
  %v370 = vpop.permute.xlu0 %369
  %371 = vrot.lane.b32.xlu0 %v327, 15
  %v372 = vpop.permute.xlu0 %371
  %v373 = vsel %vm346, %v362, %v364
  %v374 = vsel %vm346, %v364, %v366
  %v375 = vsel %vm346, %v368, %v370
  %v376 = vsel %vm346, %v370, %v372
  %v381 = vsel %vm150, 1, 0
  %v382 = vsel %vm151, 1, 0
  %v383 = vsel %vm152, 1, 0
  %v384 = vsel %vm153, 1, 0
  %vm385 = vcmp.eq.s32.totalorder %v381, 1
  %vm386 = vcmp.eq.s32.totalorder %v382, 1
  %vm387 = vcmp.eq.s32.totalorder %v383, 1
  %vm388 = vcmp.eq.s32.totalorder %v384, 1
  %v389 = vsel %vm385, %v347, 0.0
  %v390 = vsel %vm386, %v348, 0.0
  %v391 = vsel %vm387, %v373, 0.0
  %v392 = vsel %vm388, %v374, 0.0
  %v393 = vsel %vm385, %v349, 0.0
  %v394 = vsel %vm386, %v350, 0.0
  %v395 = vsel %vm387, %v375, 0.0
  %v396 = vsel %vm388, %v376, 0.0
  %397 = vst [vmem:[#allocation3 + $0x80] sm:$0xff] %v389
  %398 = vst [vmem:[#allocation3 + $0x88] sm:$0xff] %v390
  %399 = vst [vmem:[#allocation3 + $0x90] sm:$0xff] %v391
  %400 = vst [vmem:[#allocation3 + $0x98] sm:$0xff] %v392
  %401 = vst [vmem:[#allocation3 + $0xa0] sm:$0xff] %v393
  %402 = vst [vmem:[#allocation3 + $0xa8] sm:$0xff] %v394
  %403 = vst [vmem:[#allocation3 + $0xb0] sm:$0xff] %v395
  %404 = vst [vmem:[#allocation3 + $0xb8] sm:$0xff] %v396
  %v405 = vld [vmem:[#allocation2] sm:$0xff]
  %v406 = vld [vmem:[#allocation2 + $0x8] sm:$0xff]
  %v407 = vld [vmem:[#allocation2 + $0x10] sm:$0xff]
  %v408 = vld [vmem:[#allocation2 + $0x20] sm:$0xff]
  %v409 = vld [vmem:[#allocation2 + $0x28] sm:$0xff]
  %v410 = vld [vmem:[#allocation2 + $0x30] sm:$0xff]
  %v411 = vld [vmem:[%s61] sm:$0xff]
  %v412 = vld [vmem:[%s61 + $0x8] sm:$0xff]
  %v413 = vld [vmem:[%s61 + $0x10] sm:$0xff]
  %v414 = vld [vmem:[%s61 + $0x20] sm:$0xff]
  %v415 = vld [vmem:[%s61 + $0x28] sm:$0xff]
  %v416 = vld [vmem:[%s61 + $0x30] sm:$0xff]
  %423 = vrot.lane.b32.xlu0 %v405, 1
  %v424 = vpop.permute.xlu0 %423
  %425 = vrot.lane.b32.xlu0 %v406, 1
  %v426 = vpop.permute.xlu0 %425
  %427 = vrot.lane.b32.xlu0 %v407, 1
  %v428 = vpop.permute.xlu0 %427
  %429 = vrot.lane.b32.xlu0 %v408, 1
  %v430 = vpop.permute.xlu0 %429
  %431 = vrot.lane.b32.xlu0 %v409, 1
  %v432 = vpop.permute.xlu0 %431
  %433 = vrot.lane.b32.xlu0 %v410, 1
  %v434 = vpop.permute.xlu0 %433
  %vm435 = vcmask 7168
  %v436 = vsel %vm435, %v424, %v426
  %v437 = vsel %vm435, %v426, %v428
  %v438 = vsel %vm435, %v430, %v432
  %v439 = vsel %vm435, %v432, %v434
  %450 = vrot.lane.b32.xlu0 %v411, 1
  %v451 = vpop.permute.xlu0 %450
  %452 = vrot.lane.b32.xlu0 %v412, 1
  %v453 = vpop.permute.xlu0 %452
  %454 = vrot.lane.b32.xlu0 %v413, 1
  %v455 = vpop.permute.xlu0 %454
  %456 = vrot.lane.b32.xlu0 %v414, 1
  %v457 = vpop.permute.xlu0 %456
  %458 = vrot.lane.b32.xlu0 %v415, 1
  %v459 = vpop.permute.xlu0 %458
  %460 = vrot.lane.b32.xlu0 %v416, 1
  %v461 = vpop.permute.xlu0 %460
  %v462 = vsel %vm435, %v451, %v453
  %v463 = vsel %vm435, %v453, %v455
  %v464 = vsel %vm435, %v457, %v459
  %v465 = vsel %vm435, %v459, %v461
  %v470 = vsel %vm223, %v436, 0.0
  %v471 = vsel %vm224, %v437, 0.0
  %v472 = vsel %vm225, %v462, 0.0
  %v473 = vsel %vm226, %v463, 0.0
  %v474 = vsel %vm223, %v438, 0.0
  %v475 = vsel %vm224, %v439, 0.0
  %v476 = vsel %vm225, %v464, 0.0
  %v477 = vsel %vm226, %v465, 0.0
  %478 = vst [vmem:[#allocation3 + $0xc0] sm:$0xff] %v470
  %479 = vst [vmem:[#allocation3 + $0xc8] sm:$0xff] %v471
  %480 = vst [vmem:[#allocation3 + $0xd0] sm:$0xff] %v472
  %481 = vst [vmem:[#allocation3 + $0xd8] sm:$0xff] %v473
  %482 = vst [vmem:[#allocation3 + $0xe0] sm:$0xff] %v474
  %483 = vst [vmem:[#allocation3 + $0xe8] sm:$0xff] %v475
  %484 = vst [vmem:[#allocation3 + $0xf0] sm:$0xff] %v476
  %485 = vst [vmem:[#allocation3 + $0xf8] sm:$0xff] %v477
  %v486 = vld [vmem:[#allocation2 + $0x8] sm:$0xff]
  %v487 = vld [vmem:[#allocation2 + $0x10] sm:$0xff]
  %v488 = vld [vmem:[#allocation2 + $0x28] sm:$0xff]
  %v489 = vld [vmem:[#allocation2 + $0x30] sm:$0xff]
  %v490 = vld [vmem:[%s61 + $0x8] sm:$0xff]
  %v491 = vld [vmem:[%s61 + $0x10] sm:$0xff]
  %v492 = vld [vmem:[%s61 + $0x28] sm:$0xff]
  %v493 = vld [vmem:[%s61 + $0x30] sm:$0xff]
  %494 = vst [vmem:[#allocation3 + $0x100] sm:$0xff] %v486
  %495 = vst [vmem:[#allocation3 + $0x108] sm:$0xff] %v487
  %496 = vst [vmem:[#allocation3 + $0x110] sm:$0xff] %v490
  %497 = vst [vmem:[#allocation3 + $0x118] sm:$0xff] %v491
  %498 = vst [vmem:[#allocation3 + $0x120] sm:$0xff] %v488
  %499 = vst [vmem:[#allocation3 + $0x128] sm:$0xff] %v489
  %500 = vst [vmem:[#allocation3 + $0x130] sm:$0xff] %v492
  %501 = vst [vmem:[#allocation3 + $0x138] sm:$0xff] %v493
  %v502 = vld [vmem:[#allocation2 + $0x8] sm:$0xff]
  %v503 = vld [vmem:[#allocation2 + $0x10] sm:$0xff]
  %v504 = vld [vmem:[#allocation2 + $0x18] sm:$0xff]
  %v505 = vld [vmem:[#allocation2 + $0x28] sm:$0xff]
  %v506 = vld [vmem:[#allocation2 + $0x30] sm:$0xff]
  %v507 = vld [vmem:[#allocation2 + $0x38] sm:$0xff]
  %v508 = vld [vmem:[%s61 + $0x8] sm:$0xff]
  %v509 = vld [vmem:[%s61 + $0x10] sm:$0xff]
  %v510 = vld [vmem:[%s61 + $0x18] sm:$0xff]
  %v511 = vld [vmem:[%s61 + $0x28] sm:$0xff]
  %v512 = vld [vmem:[%s61 + $0x30] sm:$0xff]
  %v513 = vld [vmem:[%s61 + $0x38] sm:$0xff]
  %520 = vrot.lane.b32.xlu0 %v502, 127
  %v521 = vpop.permute.xlu0 %520
  %522 = vrot.lane.b32.xlu0 %v503, 127
  %v523 = vpop.permute.xlu0 %522
  %524 = vrot.lane.b32.xlu0 %v504, 127
  %v525 = vpop.permute.xlu0 %524
  %526 = vrot.lane.b32.xlu0 %v505, 127
  %v527 = vpop.permute.xlu0 %526
  %528 = vrot.lane.b32.xlu0 %v506, 127
  %v529 = vpop.permute.xlu0 %528
  %530 = vrot.lane.b32.xlu0 %v507, 127
  %v531 = vpop.permute.xlu0 %530
  %vm532 = vcmask 1039360
  %v533 = vsel %vm532, %v521, %v523
  %v534 = vsel %vm532, %v523, %v525
  %v535 = vsel %vm532, %v527, %v529
  %v536 = vsel %vm532, %v529, %v531
  %547 = vrot.lane.b32.xlu0 %v508, 127
  %v548 = vpop.permute.xlu0 %547
  %549 = vrot.lane.b32.xlu0 %v509, 127
  %v550 = vpop.permute.xlu0 %549
  %551 = vrot.lane.b32.xlu0 %v510, 127
  %v552 = vpop.permute.xlu0 %551
  %553 = vrot.lane.b32.xlu0 %v511, 127
  %v554 = vpop.permute.xlu0 %553
  %555 = vrot.lane.b32.xlu0 %v512, 127
  %v556 = vpop.permute.xlu0 %555
  %557 = vrot.lane.b32.xlu0 %v513, 127
  %v558 = vpop.permute.xlu0 %557
  %v559 = vsel %vm532, %v548, %v550
  %v560 = vsel %vm532, %v550, %v552
  %v561 = vsel %vm532, %v554, %v556
  %v562 = vsel %vm532, %v556, %v558
  %v567 = vsel %vm385, %v533, 0.0
  %v568 = vsel %vm386, %v534, 0.0
  %v569 = vsel %vm387, %v559, 0.0
  %v570 = vsel %vm388, %v560, 0.0
  %v571 = vsel %vm385, %v535, 0.0
  %v572 = vsel %vm386, %v536, 0.0
  %v573 = vsel %vm387, %v561, 0.0
  %v574 = vsel %vm388, %v562, 0.0
  %575 = vst [vmem:[#allocation3 + $0x140] sm:$0xff] %v567
  %576 = vst [vmem:[#allocation3 + $0x148] sm:$0xff] %v568
  %577 = vst [vmem:[#allocation3 + $0x150] sm:$0xff] %v569
  %578 = vst [vmem:[#allocation3 + $0x158] sm:$0xff] %v570
  %579 = vst [vmem:[#allocation3 + $0x160] sm:$0xff] %v571
  %580 = vst [vmem:[#allocation3 + $0x168] sm:$0xff] %v572
  %581 = vst [vmem:[#allocation3 + $0x170] sm:$0xff] %v573
  %582 = vst [vmem:[#allocation3 + $0x178] sm:$0xff] %v574
  %v583 = vld [vmem:[#allocation2 + $0x8] sm:$0xff]
  %v584 = vld [vmem:[#allocation2 + $0x10] sm:$0xff]
  %v585 = vld [vmem:[#allocation2 + $0x18] sm:$0xff]
  %v586 = vld [vmem:[#allocation2 + $0x28] sm:$0xff]
  %v587 = vld [vmem:[#allocation2 + $0x30] sm:$0xff]
  %v588 = vld [vmem:[#allocation2 + $0x38] sm:$0xff]
  %v589 = vld [vmem:[%s61 + $0x8] sm:$0xff]
  %v590 = vld [vmem:[%s61 + $0x10] sm:$0xff]
  %v591 = vld [vmem:[%s61 + $0x18] sm:$0xff]
  %v592 = vld [vmem:[%s61 + $0x28] sm:$0xff]
  %v593 = vld [vmem:[%s61 + $0x30] sm:$0xff]
  %v594 = vld [vmem:[%s61 + $0x38] sm:$0xff]
  %601 = vrot.lane.b32.xlu0 %v583, 113
  %v602 = vpop.permute.xlu0 %601
  %603 = vrot.lane.b32.xlu0 %v584, 113
  %v604 = vpop.permute.xlu0 %603
  %605 = vrot.lane.b32.xlu0 %v585, 113
  %v606 = vpop.permute.xlu0 %605
  %607 = vrot.lane.b32.xlu0 %v586, 113
  %v608 = vpop.permute.xlu0 %607
  %609 = vrot.lane.b32.xlu0 %v587, 113
  %v610 = vpop.permute.xlu0 %609
  %611 = vrot.lane.b32.xlu0 %v588, 113
  %v612 = vpop.permute.xlu0 %611
  %vm613 = vcmask 924672
  %v614 = vsel %vm613, %v602, %v604
  %v615 = vsel %vm613, %v604, %v606
  %v616 = vsel %vm613, %v608, %v610
  %v617 = vsel %vm613, %v610, %v612
  %628 = vrot.lane.b32.xlu0 %v589, 113
  %v629 = vpop.permute.xlu0 %628
  %630 = vrot.lane.b32.xlu0 %v590, 113
  %v631 = vpop.permute.xlu0 %630
  %632 = vrot.lane.b32.xlu0 %v591, 113
  %v633 = vpop.permute.xlu0 %632
  %634 = vrot.lane.b32.xlu0 %v592, 113
  %v635 = vpop.permute.xlu0 %634
  %636 = vrot.lane.b32.xlu0 %v593, 113
  %v637 = vpop.permute.xlu0 %636
  %638 = vrot.lane.b32.xlu0 %v594, 113
  %v639 = vpop.permute.xlu0 %638
  %v640 = vsel %vm613, %v629, %v631
  %v641 = vsel %vm613, %v631, %v633
  %v642 = vsel %vm613, %v635, %v637
  %v643 = vsel %vm613, %v637, %v639
  %v648 = vsel %vm223, %v614, 0.0
  %v649 = vsel %vm224, %v615, 0.0
  %v650 = vsel %vm225, %v640, 0.0
  %v651 = vsel %vm226, %v641, 0.0
  %v652 = vsel %vm223, %v616, 0.0
  %v653 = vsel %vm224, %v617, 0.0
  %v654 = vsel %vm225, %v642, 0.0
  %v655 = vsel %vm226, %v643, 0.0
  %656 = vst [vmem:[#allocation3 + $0x180] sm:$0xff] %v648
  %657 = vst [vmem:[#allocation3 + $0x188] sm:$0xff] %v649
  %658 = vst [vmem:[#allocation3 + $0x190] sm:$0xff] %v650
  %659 = vst [vmem:[#allocation3 + $0x198] sm:$0xff] %v651
  %660 = vst [vmem:[#allocation3 + $0x1a0] sm:$0xff] %v652
  %661 = vst [vmem:[#allocation3 + $0x1a8] sm:$0xff] %v653
  %662 = vst [vmem:[#allocation3 + $0x1b0] sm:$0xff] %v654
  %663 = vst [vmem:[#allocation3 + $0x1b8] sm:$0xff] %v655
  %v664 = vld [vmem:[#allocation2 + $0x8] sm:$0xff]
  %v665 = vld [vmem:[#allocation2 + $0x10] sm:$0xff]
  %v666 = vld [vmem:[#allocation2 + $0x18] sm:$0xff]
  %v667 = vld [vmem:[#allocation2 + $0x28] sm:$0xff]
  %v668 = vld [vmem:[#allocation2 + $0x30] sm:$0xff]
  %v669 = vld [vmem:[#allocation2 + $0x38] sm:$0xff]
  %v670 = vld [vmem:[%s61 + $0x8] sm:$0xff]
  %v671 = vld [vmem:[%s61 + $0x10] sm:$0xff]
  %v672 = vld [vmem:[%s61 + $0x18] sm:$0xff]
  %v673 = vld [vmem:[%s61 + $0x28] sm:$0xff]
  %v674 = vld [vmem:[%s61 + $0x30] sm:$0xff]
  %v675 = vld [vmem:[%s61 + $0x38] sm:$0xff]
  %682 = vrot.lane.b32.xlu0 %v664, 112
  %v683 = vpop.permute.xlu0 %682
  %684 = vrot.lane.b32.xlu0 %v665, 112
  %v685 = vpop.permute.xlu0 %684
  %686 = vrot.lane.b32.xlu0 %v666, 112
  %v687 = vpop.permute.xlu0 %686
  %688 = vrot.lane.b32.xlu0 %v667, 112
  %v689 = vpop.permute.xlu0 %688
  %690 = vrot.lane.b32.xlu0 %v668, 112
  %v691 = vpop.permute.xlu0 %690
  %692 = vrot.lane.b32.xlu0 %v669, 112
  %v693 = vpop.permute.xlu0 %692
  %vm694 = vcmask 916480
  %v695 = vsel %vm694, %v683, %v685
  %v696 = vsel %vm694, %v685, %v687
  %v697 = vsel %vm694, %v689, %v691
  %v698 = vsel %vm694, %v691, %v693
  %709 = vrot.lane.b32.xlu0 %v670, 112
  %v710 = vpop.permute.xlu0 %709
  %711 = vrot.lane.b32.xlu0 %v671, 112
  %v712 = vpop.permute.xlu0 %711
  %713 = vrot.lane.b32.xlu0 %v672, 112
  %v714 = vpop.permute.xlu0 %713
  %715 = vrot.lane.b32.xlu0 %v673, 112
  %v716 = vpop.permute.xlu0 %715
  %717 = vrot.lane.b32.xlu0 %v674, 112
  %v718 = vpop.permute.xlu0 %717
  %719 = vrot.lane.b32.xlu0 %v675, 112
  %v720 = vpop.permute.xlu0 %719
  %v721 = vsel %vm694, %v710, %v712
  %v722 = vsel %vm694, %v712, %v714
  %v723 = vsel %vm694, %v716, %v718
  %v724 = vsel %vm694, %v718, %v720
  %729 = vst [vmem:[#allocation3 + $0x1c0] sm:$0xff] %v695
  %730 = vst [vmem:[#allocation3 + $0x1c8] sm:$0xff] %v696
  %731 = vst [vmem:[#allocation3 + $0x1d0] sm:$0xff] %v721
  %732 = vst [vmem:[#allocation3 + $0x1d8] sm:$0xff] %v722
  %733 = vst [vmem:[#allocation3 + $0x1e0] sm:$0xff] %v697
  %734 = vst [vmem:[#allocation3 + $0x1e8] sm:$0xff] %v698
  %735 = vst [vmem:[#allocation3 + $0x1f0] sm:$0xff] %v723
  %736 = vst [vmem:[#allocation3 + $0x1f8] sm:$0xff] %v724
  %v737 = vld [vmem:[#allocation2 + $0x8] sm:$0xff]
  %v738 = vld [vmem:[#allocation2 + $0x10] sm:$0xff]
  %v739 = vld [vmem:[#allocation2 + $0x18] sm:$0xff]
  %v740 = vld [vmem:[#allocation2 + $0x28] sm:$0xff]
  %v741 = vld [vmem:[#allocation2 + $0x30] sm:$0xff]
  %v742 = vld [vmem:[#allocation2 + $0x38] sm:$0xff]
  %v743 = vld [vmem:[%s61 + $0x8] sm:$0xff]
  %v744 = vld [vmem:[%s61 + $0x10] sm:$0xff]
  %v745 = vld [vmem:[%s61 + $0x18] sm:$0xff]
  %v746 = vld [vmem:[%s61 + $0x28] sm:$0xff]
  %v747 = vld [vmem:[%s61 + $0x30] sm:$0xff]
  %v748 = vld [vmem:[%s61 + $0x38] sm:$0xff]
  %755 = vrot.lane.b32.xlu0 %v737, 111
  %v756 = vpop.permute.xlu0 %755
  %757 = vrot.lane.b32.xlu0 %v738, 111
  %v758 = vpop.permute.xlu0 %757
  %759 = vrot.lane.b32.xlu0 %v739, 111
  %v760 = vpop.permute.xlu0 %759
  %761 = vrot.lane.b32.xlu0 %v740, 111
  %v762 = vpop.permute.xlu0 %761
  %763 = vrot.lane.b32.xlu0 %v741, 111
  %v764 = vpop.permute.xlu0 %763
  %765 = vrot.lane.b32.xlu0 %v742, 111
  %v766 = vpop.permute.xlu0 %765
  %vm767 = vcmask 908288
  %v768 = vsel %vm767, %v756, %v758
  %v769 = vsel %vm767, %v758, %v760
  %v770 = vsel %vm767, %v762, %v764
  %v771 = vsel %vm767, %v764, %v766
  %782 = vrot.lane.b32.xlu0 %v743, 111
  %v783 = vpop.permute.xlu0 %782
  %784 = vrot.lane.b32.xlu0 %v744, 111
  %v785 = vpop.permute.xlu0 %784
  %786 = vrot.lane.b32.xlu0 %v745, 111
  %v787 = vpop.permute.xlu0 %786
  %788 = vrot.lane.b32.xlu0 %v746, 111
  %v789 = vpop.permute.xlu0 %788
  %790 = vrot.lane.b32.xlu0 %v747, 111
  %v791 = vpop.permute.xlu0 %790
  %792 = vrot.lane.b32.xlu0 %v748, 111
  %v793 = vpop.permute.xlu0 %792
  %v794 = vsel %vm767, %v783, %v785
  %v795 = vsel %vm767, %v785, %v787
  %v796 = vsel %vm767, %v789, %v791
  %v797 = vsel %vm767, %v791, %v793
  %v802 = vsel %vm385, %v768, 0.0
  %v803 = vsel %vm386, %v769, 0.0
  %v804 = vsel %vm387, %v794, 0.0
  %v805 = vsel %vm388, %v795, 0.0
  %v806 = vsel %vm385, %v770, 0.0
  %v807 = vsel %vm386, %v771, 0.0
  %v808 = vsel %vm387, %v796, 0.0
  %v809 = vsel %vm388, %v797, 0.0
  %810 = vst [vmem:[#allocation3 + $0x200] sm:$0xff] %v802
  %811 = vst [vmem:[#allocation3 + $0x208] sm:$0xff] %v803
  %812 = vst [vmem:[#allocation3 + $0x210] sm:$0xff] %v804
  %813 = vst [vmem:[#allocation3 + $0x218] sm:$0xff] %v805
  %814 = vst [vmem:[#allocation3 + $0x220] sm:$0xff] %v806
  %815 = vst [vmem:[#allocation3 + $0x228] sm:$0xff] %v807
  %816 = vst [vmem:[#allocation3 + $0x230] sm:$0xff] %v808
  %817 = vst [vmem:[#allocation3 + $0x238] sm:$0xff] %v809
  %v818 = vld [vmem:[%s0] sm:$0xff]
  %v819 = vld [vmem:[%s0 + $0x8] sm:$0xff]
  %v820 = vld [vmem:[%s0 + $0x10] sm:$0xff]
  %v821 = vld [vmem:[%s0 + $0x18] sm:$0xff]
  %v822 = vld [vmem:[%s0 + $0x20] sm:$0xff]
  %v823 = vld [vmem:[%s0 + $0x28] sm:$0xff]
  %v824 = vld [vmem:[%s0 + $0x30] sm:$0xff]
  %v825 = vld [vmem:[%s0 + $0x38] sm:$0xff]
  %v826 = vld [vmem:[#allocation3] sm:$0xff]
  %v827 = vld [vmem:[#allocation3 + $0x8] sm:$0xff]
  %v828 = vld [vmem:[#allocation3 + $0x10] sm:$0xff]
  %v829 = vld [vmem:[#allocation3 + $0x18] sm:$0xff]
  %v830 = vld [vmem:[#allocation3 + $0x20] sm:$0xff]
  %v831 = vld [vmem:[#allocation3 + $0x28] sm:$0xff]
  %v832 = vld [vmem:[#allocation3 + $0x30] sm:$0xff]
  %v833 = vld [vmem:[#allocation3 + $0x38] sm:$0xff]
  %v834 = vld [vmem:[#allocation3 + $0x40] sm:$0xff]
  %v835 = vld [vmem:[#allocation3 + $0x48] sm:$0xff]
  %v836 = vld [vmem:[#allocation3 + $0x50] sm:$0xff]
  %v837 = vld [vmem:[#allocation3 + $0x58] sm:$0xff]
  %v838 = vld [vmem:[#allocation3 + $0x60] sm:$0xff]
  %v839 = vld [vmem:[#allocation3 + $0x68] sm:$0xff]
  %v840 = vld [vmem:[#allocation3 + $0x70] sm:$0xff]
  %v841 = vld [vmem:[#allocation3 + $0x78] sm:$0xff]
  %v842 = vld [vmem:[#allocation3 + $0x80] sm:$0xff]
  %v843 = vld [vmem:[#allocation3 + $0x88] sm:$0xff]
  %v844 = vld [vmem:[#allocation3 + $0x90] sm:$0xff]
  %v845 = vld [vmem:[#allocation3 + $0x98] sm:$0xff]
  %v846 = vld [vmem:[#allocation3 + $0xa0] sm:$0xff]
  %v847 = vld [vmem:[#allocation3 + $0xa8] sm:$0xff]
  %v848 = vld [vmem:[#allocation3 + $0xb0] sm:$0xff]
  %v849 = vld [vmem:[#allocation3 + $0xb8] sm:$0xff]
  %v850 = vld [vmem:[#allocation3 + $0xc0] sm:$0xff]
  %v851 = vld [vmem:[#allocation3 + $0xc8] sm:$0xff]
  %v852 = vld [vmem:[#allocation3 + $0xd0] sm:$0xff]
  %v853 = vld [vmem:[#allocation3 + $0xd8] sm:$0xff]
  %v854 = vld [vmem:[#allocation3 + $0xe0] sm:$0xff]
  %v855 = vld [vmem:[#allocation3 + $0xe8] sm:$0xff]
  %v856 = vld [vmem:[#allocation3 + $0xf0] sm:$0xff]
  %v857 = vld [vmem:[#allocation3 + $0xf8] sm:$0xff]
  %v858 = vld [vmem:[#allocation3 + $0x100] sm:$0xff]
  %v859 = vld [vmem:[#allocation3 + $0x108] sm:$0xff]
  %v860 = vld [vmem:[#allocation3 + $0x110] sm:$0xff]
  %v861 = vld [vmem:[#allocation3 + $0x118] sm:$0xff]
  %v862 = vld [vmem:[#allocation3 + $0x120] sm:$0xff]
  %v863 = vld [vmem:[#allocation3 + $0x128] sm:$0xff]
  %v864 = vld [vmem:[#allocation3 + $0x130] sm:$0xff]
  %v865 = vld [vmem:[#allocation3 + $0x138] sm:$0xff]
  %v866 = vld [vmem:[#allocation3 + $0x140] sm:$0xff]
  %v867 = vld [vmem:[#allocation3 + $0x148] sm:$0xff]
  %v868 = vld [vmem:[#allocation3 + $0x150] sm:$0xff]
  %v869 = vld [vmem:[#allocation3 + $0x158] sm:$0xff]
  %v870 = vld [vmem:[#allocation3 + $0x160] sm:$0xff]
  %v871 = vld [vmem:[#allocation3 + $0x168] sm:$0xff]
  %v872 = vld [vmem:[#allocation3 + $0x170] sm:$0xff]
  %v873 = vld [vmem:[#allocation3 + $0x178] sm:$0xff]
  %v874 = vld [vmem:[#allocation3 + $0x180] sm:$0xff]
  %v875 = vld [vmem:[#allocation3 + $0x188] sm:$0xff]
  %v876 = vld [vmem:[#allocation3 + $0x190] sm:$0xff]
  %v877 = vld [vmem:[#allocation3 + $0x198] sm:$0xff]
  %v878 = vld [vmem:[#allocation3 + $0x1a0] sm:$0xff]
  %v879 = vld [vmem:[#allocation3 + $0x1a8] sm:$0xff]
  %v880 = vld [vmem:[#allocation3 + $0x1b0] sm:$0xff]
  %v881 = vld [vmem:[#allocation3 + $0x1b8] sm:$0xff]
  %v882 = vld [vmem:[#allocation3 + $0x1c0] sm:$0xff]
  %v883 = vld [vmem:[#allocation3 + $0x1c8] sm:$0xff]
  %v884 = vld [vmem:[#allocation3 + $0x1d0] sm:$0xff]
  %v885 = vld [vmem:[#allocation3 + $0x1d8] sm:$0xff]
  %v886 = vld [vmem:[#allocation3 + $0x1e0] sm:$0xff]
  %v887 = vld [vmem:[#allocation3 + $0x1e8] sm:$0xff]
  %v888 = vld [vmem:[#allocation3 + $0x1f0] sm:$0xff]
  %v889 = vld [vmem:[#allocation3 + $0x1f8] sm:$0xff]
  %v890 = vld [vmem:[#allocation3 + $0x200] sm:$0xff]
  %v891 = vld [vmem:[#allocation3 + $0x208] sm:$0xff]
  %v892 = vld [vmem:[#allocation3 + $0x210] sm:$0xff]
  %v893 = vld [vmem:[#allocation3 + $0x218] sm:$0xff]
  %v894 = vld [vmem:[#allocation3 + $0x220] sm:$0xff]
  %v895 = vld [vmem:[#allocation3 + $0x228] sm:$0xff]
  %v896 = vld [vmem:[#allocation3 + $0x230] sm:$0xff]
  %v897 = vld [vmem:[#allocation3 + $0x238] sm:$0xff]
  %v898 = vld [vmem:[%s1] sm:$0xff]
  %v899 = vld [vmem:[%s1 + $0x8] sm:$0xff]
  %v900 = vld [vmem:[%s1 + $0x10] sm:$0xff]
  %v901 = vld [vmem:[%s1 + $0x18] sm:$0xff]
  %903 = vset.pattern.permute.xlu0 0
  %904 = vperm.xlu0 %903, %v898
  %v905 = vpop.permute.xlu0 %904
  %908 = vset.pattern.permute.xlu0 0
  %909 = vperm.xlu0 %908, %v899
  %v910 = vpop.permute.xlu0 %909
  %913 = vset.pattern.permute.xlu0 0
  %914 = vperm.xlu0 %913, %v900
  %v915 = vpop.permute.xlu0 %914
  %918 = vset.pattern.permute.xlu0 0
  %919 = vperm.xlu0 %918, %v901
  %v920 = vpop.permute.xlu0 %919
  %v923 = vsel %vm273, %v819, 0
  %v926 = vsel %vm273, %v821, 0
  %v929 = vsel %vm273, %v823, 0
  %v932 = vsel %vm273, %v825, 0
  %934 = vmatprep.subr.mxu0 %v827
  %935 = vmatpush1.msra.mxu0 %v826
  %936 = vmatprep.subr.mxu0 %v831
  %937 = vmatpush1.msra.mxu0 %v830
  %938 = vmatprep.subr.mxu0 %v835
  %939 = vmatpush1.msra.mxu0 %v834
  %940 = vmatprep.subr.mxu0 %v839
  %941 = vmatpush1.msra.mxu0 %v838
  %942 = vmatprep.subr.mxu0 %v843
  %943 = vmatpush1.msra.mxu0 %v842
  %944 = vmatprep.subr.mxu0 %v847
  %945 = vmatpush1.msra.mxu0 %v846
  %946 = vmatprep.subr.mxu0 %v851
  %947 = vmatpush1.msra.mxu0 %v850
  %948 = vmatprep.subr.mxu0 %v855
  %949 = vmatpush1.msra.mxu0 %v854
  %950 = vmatprep.subr.mxu0 %v859
  %951 = vmatpush1.msra.mxu0 %v858
  %952 = vmatprep.subr.mxu0 %v863
  %953 = vmatpush1.msra.mxu0 %v862
  %954 = vmatprep.subr.mxu0 %v867
  %955 = vmatpush1.msra.mxu0 %v866
  %956 = vmatprep.subr.mxu0 %v871
  %957 = vmatpush1.msra.mxu0 %v870
  %958 = vmatprep.subr.mxu0 %v875
  %959 = vmatpush1.msra.mxu0 %v874
  %960 = vmatprep.subr.mxu0 %v879
  %961 = vmatpush1.msra.mxu0 %v878
  %962 = vmatprep.subr.mxu0 %v883
  %963 = vmatpush1.msra.mxu0 %v882
  %964 = vmatprep.subr.mxu0 %v887
  %965 = vmatpush1.msra.mxu0 %v886
  %966 = vmatprep.subr.mxu0 %v891
  %967 = vmatpush1.msra.mxu0 %v890
  %968 = vmatprep.subr.mxu0 %v895
  %969 = vmatpush1.msra.mxu0 %v894
  %970 = vmatprep.subr.mxu0 0.0
  %971 = vmatpush1.msra.mxu0 0.0
  %972 = vmatprep.subr.mxu0 0.0
  %973 = vmatpush1.msra.mxu0 0.0
  %974 = vmatprep.subr.mxu0 0.0
  %975 = vmatpush1.msra.mxu0 0.0
  %976 = vmatprep.subr.mxu0 0.0
  %977 = vmatpush1.msra.mxu0 0.0
  %978 = vmatprep.subr.mxu0 0.0
  %979 = vmatpush1.msra.mxu0 0.0
  %980 = vmatprep.subr.mxu0 0.0
  %981 = vmatpush1.msra.mxu0 0.0
  %982 = vmatprep.subr.mxu0 0.0
  %983 = vmatpush1.msra.mxu0 0.0
  %984 = vmatprep.subr.mxu0 0.0
  %985 = vmatpush1.msra.mxu0 0.0
  %986 = vmatprep.subr.mxu0 0.0
  %987 = vmatpush1.msra.mxu0 0.0
  %988 = vmatprep.subr.mxu0 0.0
  %989 = vmatpush1.msra.mxu0 0.0
  %990 = vmatprep.subr.mxu0 0.0
  %991 = vmatpush1.msra.mxu0 0.0
  %992 = vmatprep.subr.mxu0 0.0
  %993 = vmatpush1.msra.mxu0 0.0
  %994 = vmatprep.subr.mxu0 0.0
  %995 = vmatpush1.msra.mxu0 0.0
  %996 = vmatprep.subr.mxu0 0.0
  %997 = vmatpush1.msra.mxu0 0.0
  %998 = vmatprep.mubr.f32.mxu0 %v923
  %999 = vmatmul.mubr.f32.gmra.mrb[0].mxu0 %v818
  %v1000 = vpop.f32.mrb[0].mxu0
  %v1001 = vadd.f32 %v905, %v1000
  %v1002 = vpop.f32.mrb[0].mxu0
  %v1003 = vadd.f32 %v905, %v1002
  %1004 = vmatprep.mubr.f32.mxu0 %v926
  %1005 = vmatmul.mubr.f32.gmra.mrb[0].mxu0 %v820
  %v1006 = vpop.f32.mrb[0].mxu0
  %v1007 = vadd.f32 %v910, %v1006
  %v1008 = vpop.f32.mrb[0].mxu0
  %v1009 = vadd.f32 %v910, %v1008
  %1010 = vmatprep.mubr.f32.mxu0 %v929
  %1011 = vmatmul.mubr.f32.gmra.mrb[0].mxu0 %v822
  %v1012 = vpop.f32.mrb[0].mxu0
  %v1013 = vadd.f32 %v915, %v1012
  %v1014 = vpop.f32.mrb[0].mxu0
  %v1015 = vadd.f32 %v915, %v1014
  %1016 = vmatprep.mubr.f32.mxu0 %v932
  %1017 = vmatmul.mubr.f32.gmra.mrb[0].mxu0 %v824
  %v1018 = vpop.f32.mrb[0].mxu0
  %v1019 = vadd.f32 %v920, %v1018
  %v1020 = vpop.f32.mrb[0].mxu0
  %v1021 = vadd.f32 %v920, %v1020
  %1022 = vdwg.mxu0
  %1023 = vmatprep.subr.mxu0 %v829
  %1024 = vmatpush1.msra.mxu0 %v828
  %1025 = vmatprep.subr.mxu0 %v833
  %1026 = vmatpush1.msra.mxu0 %v832
  %1027 = vmatprep.subr.mxu0 %v837
  %1028 = vmatpush1.msra.mxu0 %v836
  %1029 = vmatprep.subr.mxu0 %v841
  %1030 = vmatpush1.msra.mxu0 %v840
  %1031 = vmatprep.subr.mxu0 %v845
  %1032 = vmatpush1.msra.mxu0 %v844
  %1033 = vmatprep.subr.mxu0 %v849
  %1034 = vmatpush1.msra.mxu0 %v848
  %1035 = vmatprep.subr.mxu0 %v853
  %1036 = vmatpush1.msra.mxu0 %v852
  %1037 = vmatprep.subr.mxu0 %v857
  %1038 = vmatpush1.msra.mxu0 %v856
  %1039 = vmatprep.subr.mxu0 %v861
  %1040 = vmatpush1.msra.mxu0 %v860
  %1041 = vmatprep.subr.mxu0 %v865
  %1042 = vmatpush1.msra.mxu0 %v864
  %1043 = vmatprep.subr.mxu0 %v869
  %1044 = vmatpush1.msra.mxu0 %v868
  %1045 = vmatprep.subr.mxu0 %v873
  %1046 = vmatpush1.msra.mxu0 %v872
  %1047 = vmatprep.subr.mxu0 %v877
  %1048 = vmatpush1.msra.mxu0 %v876
  %1049 = vmatprep.subr.mxu0 %v881
  %1050 = vmatpush1.msra.mxu0 %v880
  %1051 = vmatprep.subr.mxu0 %v885
  %1052 = vmatpush1.msra.mxu0 %v884
  %1053 = vmatprep.subr.mxu0 %v889
  %1054 = vmatpush1.msra.mxu0 %v888
  %1055 = vmatprep.subr.mxu0 %v893
  %1056 = vmatpush1.msra.mxu0 %v892
  %1057 = vmatprep.subr.mxu0 %v897
  %1058 = vmatpush1.msra.mxu0 %v896
  %1059 = vmatprep.subr.mxu0 0.0
  %1060 = vmatpush1.msra.mxu0 0.0
  %1061 = vmatprep.subr.mxu0 0.0
  %1062 = vmatpush1.msra.mxu0 0.0
  %1063 = vmatprep.subr.mxu0 0.0
  %1064 = vmatpush1.msra.mxu0 0.0
  %1065 = vmatprep.subr.mxu0 0.0
  %1066 = vmatpush1.msra.mxu0 0.0
  %1067 = vmatprep.subr.mxu0 0.0
  %1068 = vmatpush1.msra.mxu0 0.0
  %1069 = vmatprep.subr.mxu0 0.0
  %1070 = vmatpush1.msra.mxu0 0.0
  %1071 = vmatprep.subr.mxu0 0.0
  %1072 = vmatpush1.msra.mxu0 0.0
  %1073 = vmatprep.subr.mxu0 0.0
  %1074 = vmatpush1.msra.mxu0 0.0
  %1075 = vmatprep.subr.mxu0 0.0
  %1076 = vmatpush1.msra.mxu0 0.0
  %1077 = vmatprep.subr.mxu0 0.0
  %1078 = vmatpush1.msra.mxu0 0.0
  %1079 = vmatprep.subr.mxu0 0.0
  %1080 = vmatpush1.msra.mxu0 0.0
  %1081 = vmatprep.subr.mxu0 0.0
  %1082 = vmatpush1.msra.mxu0 0.0
  %1083 = vmatprep.subr.mxu0 0.0
  %1084 = vmatpush1.msra.mxu0 0.0
  %1085 = vmatprep.subr.mxu0 0.0
  %1086 = vmatpush1.msra.mxu0 0.0
  %1087 = vmatprep.mubr.f32.mxu0 %v923
  %1088 = vmatmul.mubr.f32.gmra.mrb[0].mxu0 %v818
  %v1089 = vpop.f32.mrb[0].mxu0
  %v1090 = vadd.f32 %v905, %v1089
  %v1091 = vpop.f32.mrb[0].mxu0
  %v1092 = vadd.f32 %v905, %v1091
  %1093 = vmatprep.mubr.f32.mxu0 %v926
  %1094 = vmatmul.mubr.f32.gmra.mrb[0].mxu0 %v820
  %v1095 = vpop.f32.mrb[0].mxu0
  %v1096 = vadd.f32 %v910, %v1095
  %v1097 = vpop.f32.mrb[0].mxu0
  %v1098 = vadd.f32 %v910, %v1097
  %1099 = vmatprep.mubr.f32.mxu0 %v929
  %1100 = vmatmul.mubr.f32.gmra.mrb[0].mxu0 %v822
  %v1101 = vpop.f32.mrb[0].mxu0
  %v1102 = vadd.f32 %v915, %v1101
  %v1103 = vpop.f32.mrb[0].mxu0
  %v1104 = vadd.f32 %v915, %v1103
  %1105 = vmatprep.mubr.f32.mxu0 %v932
  %1106 = vmatmul.mubr.f32.gmra.mrb[0].mxu0 %v824
  %v1107 = vpop.f32.mrb[0].mxu0
  %v1108 = vadd.f32 %v920, %v1107
  %v1109 = vpop.f32.mrb[0].mxu0
  %v1110 = vadd.f32 %v920, %v1109
  %1111 = vdwg.mxu0
  %v1112 = vmul.f32 %v1001, 0.5
  %v1113 = vmul.f32 %v1003, 0.5
  %v1114 = vmul.f32 %v1090, 0.5
  %v1115 = vmul.f32 %v1092, 0.5
  %v1116 = vmul.f32 %v1007, 0.5
  %v1117 = vmul.f32 %v1009, 0.5
  %v1118 = vmul.f32 %v1096, 0.5
  %v1119 = vmul.f32 %v1098, 0.5
  %v1120 = vmul.f32 %v1013, 0.5
  %v1121 = vmul.f32 %v1015, 0.5
  %v1122 = vmul.f32 %v1102, 0.5
  %v1123 = vmul.f32 %v1104, 0.5
  %v1124 = vtanh.pop %v1112
  %v1125 = vtanh.pop %v1113
  %v1126 = vtanh.pop %v1114
  %v1127 = vtanh.pop %v1115
  %v1128 = vtanh.pop %v1116
  %v1129 = vtanh.pop %v1117
  %v1130 = vtanh.pop %v1118
  %v1131 = vtanh.pop %v1119
  %v1132 = vtanh.pop %v1120
  %v1133 = vtanh.pop %v1121
  %v1134 = vtanh.pop %v1122
  %v1135 = vtanh.pop %v1123
  %v1136 = vmul.f32 %v1124, 0.5
  %v1137 = vmul.f32 %v1125, 0.5
  %v1138 = vmul.f32 %v1126, 0.5
  %v1139 = vmul.f32 %v1127, 0.5
  %v1140 = vmul.f32 %v1128, 0.5
  %v1141 = vmul.f32 %v1129, 0.5
  %v1142 = vmul.f32 %v1130, 0.5
  %v1143 = vmul.f32 %v1131, 0.5
  %v1144 = vmul.f32 %v1132, 0.5
  %v1145 = vmul.f32 %v1133, 0.5
  %v1146 = vmul.f32 %v1134, 0.5
  %v1147 = vmul.f32 %v1135, 0.5
  %v1148 = vadd.f32 %v1136, 0.5
  %v1149 = vadd.f32 %v1137, 0.5
  %v1150 = vadd.f32 %v1138, 0.5
  %v1151 = vadd.f32 %v1139, 0.5
  %v1152 = vadd.f32 %v1140, 0.5
  %v1153 = vadd.f32 %v1141, 0.5
  %v1154 = vadd.f32 %v1142, 0.5
  %v1155 = vadd.f32 %v1143, 0.5
  %v1156 = vadd.f32 %v1144, 0.5
  %v1157 = vadd.f32 %v1145, 0.5
  %v1158 = vadd.f32 %v1146, 0.5
  %v1159 = vadd.f32 %v1147, 0.5
  %v1160 = vtanh.pop %v1019
  %v1161 = vtanh.pop %v1021
  %v1162 = vtanh.pop %v1108
  %v1163 = vtanh.pop %v1110
  %v1164 = vld [vmem:[%s4] sm:$0xff]
  %v1165 = vld [vmem:[%s4 + $0x8] sm:$0xff]
  %v1166 = vmul.f32 %v1152, %v1164
  %v1167 = vmul.f32 %v1153, %v1165
  %v1168 = vmul.f32 %v1148, %v1160
  %v1169 = vmul.f32 %v1149, %v1161
  %v1170 = vadd.f32 %v1166, %v1168
  %v1171 = vadd.f32 %v1167, %v1169
  %v1172 = vtanh.pop %v1170
  %v1173 = vtanh.pop %v1171
  %v1174 = vmul.f32 %v1156, %v1172
  %v1175 = vmul.f32 %v1157, %v1173
  %1176 = vst [vmem:[%s6] sm:$0xff] %v1170
  %1177 = vst [vmem:[%s6 + $0x8] sm:$0xff] %v1171
  %1178 = vst [vmem:[%s5] sm:$0xff] %v1174
  %1179 = vst [vmem:[%s5 + $0x8] sm:$0xff] %v1175
  %s1180 = scalar_lea.vmem %s4, 16
  %v1181 = vld [vmem:[%s1180] sm:$0xff]
  %v1182 = vld [vmem:[%s1180 + $0x8] sm:$0xff]
  %v1183 = vmul.f32 %v1154, %v1181
  %v1184 = vmul.f32 %v1155, %v1182
  %v1185 = vmul.f32 %v1150, %v1162
  %v1186 = vmul.f32 %v1151, %v1163
  %v1187 = vadd.f32 %v1183, %v1185
  %v1188 = vadd.f32 %v1184, %v1186
  %v1189 = vtanh.pop %v1187
  %v1190 = vtanh.pop %v1188
  %v1191 = vmul.f32 %v1158, %v1189
  %v1192 = vmul.f32 %v1159, %v1190
  %s1193 = scalar_lea.vmem %s6, 16
  %1194 = vst [vmem:[%s1193] sm:$0xff] %v1187
  %1195 = vst [vmem:[%s1193 + $0x8] sm:$0xff] %v1188
  %s1196 = scalar_lea.vmem %s5, 16
  %1197 = vst [vmem:[%s1196] sm:$0xff] %v1191
  %1198 = vst [vmem:[%s1196 + $0x8] sm:$0xff] %v1192
  // Predicated region
  $region22: #{conv_lstm_cell_forward.1} parent=0 // pred_check
    _
  $region23: #{conv_lstm_cell_forward.1} parent=0 // pred_check_branch
    %1200 = sbr.rel (0) target = $region25
  $region24: #{conv_lstm_cell_forward.1} parent=0 // pred_region
    _
  $region25: #{conv_lstm_cell_forward.1} parent=0 // pred_fallthru
    _
  // Predicated region
  $region26: #{conv_lstm_cell_forward.1} parent=0 // pred_check
    _
  $region27: #{conv_lstm_cell_forward.1} parent=0 // pred_check_branch
    %1202 = sbr.rel (0) target = $region29
  $region28: #{conv_lstm_cell_forward.1} parent=0 // pred_region
    _
  $region29: #{conv_lstm_cell_forward.1} parent=0 // pred_fallthru
    _
  // Predicated region
  $region30: #{conv_lstm_cell_forward.1} parent=0 // pred_check
    _
  $region31: #{conv_lstm_cell_forward.1} parent=0 // pred_check_branch
    %1204 = sbr.rel (0) target = $region33
  $region32: #{conv_lstm_cell_forward.1} parent=0 // pred_region
    _
  $region33: #{conv_lstm_cell_forward.1} parent=0 // pred_fallthru
    _
  // Predicated region
  $region34: #{conv_lstm_cell_forward.1} parent=0 // pred_check
    _
  $region35: #{conv_lstm_cell_forward.1} parent=0 // pred_check_branch
    %1206 = sbr.rel (0) target = $region37
  $region36: #{conv_lstm_cell_forward.1} parent=0 // pred_region
    _
  $region37: #{conv_lstm_cell_forward.1} parent=0 // pred_fallthru
    _

</llo_original>
